<compile_context>
chip_gen: v7x
topology: tpu7x:2x2x1
jax: 0.10.0
libtpu: 0.0.40
codegen_flags: <defaults>
</compile_context>

<pallas_src>
import jax
import jax.numpy as jnp
from jax.experimental import pallas as pl
from jax.experimental.pallas import tpu as pltpu

_LANE = 128          # lane width (last dim)
_BATCH_ALIGN = 16    # sublane-safe batch granularity for bf16 tiles
_NEG_SLOPE = 0.2


def _round_up(x, m):
    return ((x + m - 1) // m) * m


def _tpu_generation():
    """Best-effort TPU generation detection (5 / 6 / 7, 0 = unknown)."""
    try:
        kind = jax.devices()[0].device_kind.lower()
    except Exception:
        return 0
    if "v7" in kind or "7x" in kind:
        return 7
    if "v6" in kind:
        return 6
    if "v5" in kind:
        return 5
    if "v4" in kind:
        return 4
    return 0


# --------------------------------------------------------------------------
# Kernel factory: fused 3-layer MLP on one batch tile, weights VMEM-resident.
# MXU always accumulates in f32; the epilogue (bias + activation) runs in
# `epilogue_dtype` (bf16 on v6e/v7x, f32 on v5e).
# --------------------------------------------------------------------------
def _make_generator_kernel(epilogue_dtype):
    def kernel(z_ref, w1_ref, b1_ref, w2_ref, b2_ref, w3_ref, b3_ref, out_ref):
        neg = jnp.asarray(_NEG_SLOPE, epilogue_dtype)

        def layer(x, w_ref, b_ref):
            h = jnp.dot(x, w_ref[...], preferred_element_type=jnp.float32)
            return h.astype(epilogue_dtype) + b_ref[...].astype(epilogue_dtype)

        def lrelu(h):
            # maximum(h, 0.2*h): single vmax instead of compare+select.
            return jnp.maximum(h, neg * h)

        # Layer 1 / 2: Linear + LeakyReLU(0.2). bf16 MXU operands.
        h = lrelu(layer(z_ref[...], w1_ref, b1_ref)).astype(jnp.bfloat16)
        h = lrelu(layer(h, w2_ref, b2_ref)).astype(jnp.bfloat16)
        # Layer 3: Linear + tanh (tanh goes to the EUP slot).
        h = jnp.tanh(layer(h, w3_ref, b3_ref))
        out_ref[...] = h.astype(out_ref.dtype)

    return kernel


# --------------------------------------------------------------------------
# One-time parameter preparation: zero-pad feature dims to lane multiples and
# cast weights to bf16 (biases stay f32; cast in-kernel to the epilogue
# dtype). Zero padding is exact: padded K rows multiply zero activations,
# padded hidden columns get bias 0 -> lrelu(0)=0 -> contribute nothing
# downstream, padded output columns are sliced away.
# --------------------------------------------------------------------------
def prepare_generator_params(params):
    w1, b1, w2, b2, w3, b3 = params

    def pad_w(w):
        r, c = w.shape
        return jnp.pad(
            w, ((0, _round_up(r, _LANE) - r), (0, _round_up(c, _LANE) - c))
        ).astype(jnp.bfloat16)

    def pad_b(b):
        b = b.reshape(1, -1)
        c = b.shape[1]
        return jnp.pad(b, ((0, 0), (0, _round_up(c, _LANE) - c))).astype(
            jnp.float32)

    return (pad_w(w1), pad_b(b1), pad_w(w2), pad_b(b2), pad_w(w3), pad_b(b3))


# --------------------------------------------------------------------------
# Wrapper: resolves batch tiling, pads/casts the noise (unless the producer
# already emitted the padded bf16 block), calls the fused kernel and slices
# the result back to the logical shape.
# --------------------------------------------------------------------------
def generator_forward(z, padded_params, output_dim, *, batch=None,
                      batch_tile=None, out_dtype=jnp.bfloat16):
    w1, b1, w2, b2, w3, b3 = padded_params
    kp = w1.shape[0]       # padded noise dim
    hp = w1.shape[1]       # padded hidden dim (layer 1 out)
    h2p = w2.shape[1]      # padded hidden dim (layer 2 out)
    op = w3.shape[1]       # padded output dim
    out_itemsize = jnp.dtype(out_dtype).itemsize

    gen = _tpu_generation()
    epilogue_dtype = jnp.bfloat16 if gen >= 6 else jnp.float32

    B_logical = z.shape[0] if batch is None else batch
    B_in = z.shape[0]

    # Batch tiling: bigger default tiles on 128-MiB-VMEM chips; clamp to the
    # (aligned) batch so tiny batches do not burn a whole tile; on v7x make
    # sure both TensorCores get at least one tile whenever possible.
    if batch_tile is None:
        batch_tile = 512 if gen >= 7 else 1024
    b_aligned = _round_up(B_in, _BATCH_ALIGN)
    batch_tile = max(_BATCH_ALIGN,
                     min(_round_up(batch_tile, _BATCH_ALIGN), b_aligned))
    if gen >= 7 and b_aligned >= 2 * _BATCH_ALIGN:
        half = _round_up(pl.cdiv(b_aligned, 2), _BATCH_ALIGN)
        batch_tile = min(batch_tile, half)
    Bp = _round_up(b_aligned, batch_tile)
    grid = (Bp // batch_tile,)

    # Noise: skip the extra un-fused pad+cast pass over z when the producer
    # already emitted the lane-dense bf16 block (free bandwidth win).
    if z.shape == (Bp, kp) and z.dtype == jnp.bfloat16:
        zp = z
    else:
        zp = jnp.pad(
            z, ((0, Bp - z.shape[0]), (0, kp - z.shape[1]))
        ).astype(jnp.bfloat16)

    # Weights / biases: full-array blocks, constant index_map -> VMEM-resident;
    # single-buffered since they are never re-fetched.
    def resident(arr):
        return pl.BlockSpec(arr.shape, lambda i: (0, 0),
                            pipeline_mode=pl.Buffered(1))

    # VMEM budget: resident params + double-buffered z/out tiles + in-kernel
    # temporaries (counted explicitly, f32-conservative) + compiler headroom.
    param_bytes = sum(a.size * a.dtype.itemsize for a in padded_params)
    io_bytes = 2 * (batch_tile * kp * 2 + batch_tile * op * out_itemsize)
    inter_bytes = 2 * batch_tile * max(hp, h2p, op) * 4
    resident_budget = (40 << 20) if gen >= 7 else (96 << 20)
    if param_bytes + io_bytes + inter_bytes > resident_budget:
        # TODO(synk): stream w2/w3 via a K/N-tiled grid axis with a VMEM
        # accumulator instead of full-weight residency once hidden_dim pushes
        # the resident params past the per-chip VMEM budget (~4k on v7x).
        raise NotImplementedError(
            "resident weights exceed the per-chip VMEM budget; K/N-tiled "
            "weight streaming not implemented")
    vmem_cap = (48 << 20) if gen >= 7 else (100 << 20)
    vmem_limit = int(min(max(param_bytes + io_bytes + inter_bytes + (8 << 20),
                             16 << 20), vmem_cap))

    # Advisory cost estimate for XLA's scheduler.
    flops = 2 * Bp * (kp * hp + hp * h2p + h2p * op)
    transcendentals = Bp * op  # tanh
    bytes_accessed = (
        Bp * kp * 2
        + param_bytes
        + Bp * op * out_itemsize)
    cost = pl.CostEstimate(flops=flops, transcendentals=transcendentals,
                           bytes_accessed=bytes_accessed)

    out_padded = pl.pallas_call(
        _make_generator_kernel(epilogue_dtype),
        out_shape=jax.ShapeDtypeStruct((Bp, op), out_dtype),
        grid_spec=pltpu.PrefetchScalarGridSpec(
            num_scalar_prefetch=0,
            grid=grid,
            in_specs=[
                pl.BlockSpec((batch_tile, kp), lambda i: (i, 0)),  # z tile
                resident(w1), resident(b1),
                resident(w2), resident(b2),
                resident(w3), resident(b3),
            ],
            out_specs=pl.BlockSpec((batch_tile, op), lambda i: (i, 0)),
        ),
        compiler_params=pltpu.CompilerParams(
            dimension_semantics=("parallel",),
            vmem_limit_bytes=vmem_limit),
        cost_estimate=cost,
    )(zp, w1, b1, w2, b2, w3, b3)

    return out_padded[:B_logical, :output_dim]


# --------------------------------------------------------------------------
# Deterministic synthetic parameters (PyTorch-Linear-like uniform init), f32.
# --------------------------------------------------------------------------
def init_generator_params(key, noise_dim, hidden_dim, output_dim):
    ks = jax.random.split(key, 6)

    def lin(kw, kb, fan_in, fan_out):
        bound = 1.0 / jnp.sqrt(fan_in)
        w = jax.random.uniform(kw, (fan_in, fan_out), jnp.float32, -bound, bound)
        b = jax.random.uniform(kb, (1, fan_out), jnp.float32, -bound, bound)
        return w, b

    w1, b1 = lin(ks[0], ks[1], noise_dim, hidden_dim)
    w2, b2 = lin(ks[2], ks[3], hidden_dim, hidden_dim)
    w3, b3 = lin(ks[4], ks[5], hidden_dim, output_dim)
    return (w1, b1, w2, b2, w3, b3)


def _reference_forward(z, params):
    w1, b1, w2, b2, w3, b3 = params
    lrelu = lambda x: jnp.where(x >= 0, x, _NEG_SLOPE * x)
    h = lrelu(z @ w1 + b1)
    h = lrelu(h @ w2 + b2)
    return jnp.tanh(h @ w3 + b3)


if __name__ == "__main__":
    # Module-default feature sizes, small batch (non-multiple of the tile /
    # alignment to exercise the padding path).
    batch, noise_dim, hidden_dim, output_dim = 50, 100, 256, 784

    key = jax.random.PRNGKey(0)
    kz, kparam = jax.random.split(key)
    z = jax.random.normal(kz, (batch, noise_dim), dtype=jnp.float32)
    params = init_generator_params(kparam, noise_dim, hidden_dim, output_dim)
    padded_params = prepare_generator_params(params)

    out = generator_forward(z, padded_params, output_dim)
    out = jax.block_until_ready(out)

    ref = _reference_forward(z, params)
    assert out.shape == (batch, output_dim), out.shape
    assert out.dtype == jnp.bfloat16, out.dtype
    # bf16 matmul operands / epilogue / output vs. f32 reference.
    err = float(jnp.max(jnp.abs(out.astype(jnp.float32) - ref)))
    assert err < 3e-2, err

    print("KERNEL_OK")
</pallas_src>

<mosaic_0001>
module attributes {stable_mosaic.version = 11 : i64} {
  func.func @kernel(%arg0: i32, %arg1: memref<64x128xbf16, #tpu.memory_space<vmem>>, %arg2: memref<128x256xbf16, #tpu.memory_space<vmem>>, %arg3: memref<1x256xf32, #tpu.memory_space<vmem>>, %arg4: memref<256x256xbf16, #tpu.memory_space<vmem>>, %arg5: memref<1x256xf32, #tpu.memory_space<vmem>>, %arg6: memref<256x896xbf16, #tpu.memory_space<vmem>>, %arg7: memref<1x896xf32, #tpu.memory_space<vmem>>, %arg8: memref<64x896xbf16, #tpu.memory_space<vmem>>) attributes {dimension_semantics = [#tpu.dimension_semantics<parallel>], iteration_bounds = array<i64: 1>, scalar_prefetch = 0 : i64, scratch_operands = 0 : i64, tpu.core_type = #tpu.core_type<tc>, window_params = [{transform_indices = @transform_0, window_bounds = array<i64: 64, 128>}, {pipeline_mode = #tpu.pipeline_mode<synchronous>, transform_indices = @transform_1, window_bounds = array<i64: 128, 256>}, {pipeline_mode = #tpu.pipeline_mode<synchronous>, transform_indices = @transform_2, window_bounds = array<i64: 1, 256>}, {pipeline_mode = #tpu.pipeline_mode<synchronous>, transform_indices = @transform_3, window_bounds = array<i64: 256, 256>}, {pipeline_mode = #tpu.pipeline_mode<synchronous>, transform_indices = @transform_4, window_bounds = array<i64: 1, 256>}, {pipeline_mode = #tpu.pipeline_mode<synchronous>, transform_indices = @transform_5, window_bounds = array<i64: 256, 896>}, {pipeline_mode = #tpu.pipeline_mode<synchronous>, transform_indices = @transform_6, window_bounds = array<i64: 1, 896>}, {transform_indices = @transform_7, window_bounds = array<i64: 64, 896>}]} {
    %c0 = arith.constant 0 : index
    %c0_0 = arith.constant 0 : index
    %0 = vector.load %arg1[%c0, %c0_0] : memref<64x128xbf16, #tpu.memory_space<vmem>>, vector<64x128xbf16>
    %c0_1 = arith.constant 0 : index
    %c0_2 = arith.constant 0 : index
    %1 = vector.load %arg2[%c0_1, %c0_2] : memref<128x256xbf16, #tpu.memory_space<vmem>>, vector<128x256xbf16>
    %cst = arith.constant dense<0.000000e+00> : vector<64x256xf32>
    %2 = tpu.matmul %0, %1, %cst {dimension_numbers = #tpu.dot_dimension_numbers<[1], [0], [0], [1], [0, 0, 1, 1], [], []>} : vector<64x128xbf16>, vector<128x256xbf16>, vector<64x256xf32> -> vector<64x256xf32>
    %c0_3 = arith.constant 0 : index
    %c0_4 = arith.constant 0 : index
    %3 = vector.load %arg3[%c0_3, %c0_4] : memref<1x256xf32, #tpu.memory_space<vmem>>, vector<1x256xf32>
    %4 = vector.broadcast %3 : vector<1x256xf32> to vector<64x256xf32>
    %5 = arith.addf %2, %4 : vector<64x256xf32>
    %cst_5 = arith.constant 2.000000e-01 : f32
    %6 = vector.broadcast %cst_5 : f32 to vector<64x256xf32>
    %7 = arith.mulf %6, %5 : vector<64x256xf32>
    %8 = arith.maximumf %5, %7 : vector<64x256xf32>
    %9 = arith.truncf %8 : vector<64x256xf32> to vector<64x256xbf16>
    %c0_6 = arith.constant 0 : index
    %c0_7 = arith.constant 0 : index
    %10 = vector.load %arg4[%c0_6, %c0_7] : memref<256x256xbf16, #tpu.memory_space<vmem>>, vector<256x256xbf16>
    %cst_8 = arith.constant dense<0.000000e+00> : vector<64x256xf32>
    %11 = tpu.matmul %9, %10, %cst_8 {dimension_numbers = #tpu.dot_dimension_numbers<[1], [0], [0], [1], [0, 0, 1, 1], [], []>} : vector<64x256xbf16>, vector<256x256xbf16>, vector<64x256xf32> -> vector<64x256xf32>
    %c0_9 = arith.constant 0 : index
    %c0_10 = arith.constant 0 : index
    %12 = vector.load %arg5[%c0_9, %c0_10] : memref<1x256xf32, #tpu.memory_space<vmem>>, vector<1x256xf32>
    %13 = vector.broadcast %12 : vector<1x256xf32> to vector<64x256xf32>
    %14 = arith.addf %11, %13 : vector<64x256xf32>
    %cst_11 = arith.constant 2.000000e-01 : f32
    %15 = vector.broadcast %cst_11 : f32 to vector<64x256xf32>
    %16 = arith.mulf %15, %14 : vector<64x256xf32>
    %17 = arith.maximumf %14, %16 : vector<64x256xf32>
    %18 = arith.truncf %17 : vector<64x256xf32> to vector<64x256xbf16>
    %c0_12 = arith.constant 0 : index
    %c0_13 = arith.constant 0 : index
    %19 = vector.load %arg6[%c0_12, %c0_13] : memref<256x896xbf16, #tpu.memory_space<vmem>>, vector<256x896xbf16>
    %cst_14 = arith.constant dense<0.000000e+00> : vector<64x896xf32>
    %20 = tpu.matmul %18, %19, %cst_14 {dimension_numbers = #tpu.dot_dimension_numbers<[1], [0], [0], [1], [0, 0, 1, 1], [], []>} : vector<64x256xbf16>, vector<256x896xbf16>, vector<64x896xf32> -> vector<64x896xf32>
    %c0_15 = arith.constant 0 : index
    %c0_16 = arith.constant 0 : index
    %21 = vector.load %arg7[%c0_15, %c0_16] : memref<1x896xf32, #tpu.memory_space<vmem>>, vector<1x896xf32>
    %22 = vector.broadcast %21 : vector<1x896xf32> to vector<64x896xf32>
    %23 = arith.addf %20, %22 : vector<64x896xf32>
    %24 = math.tanh %23 : vector<64x896xf32>
    %25 = arith.truncf %24 : vector<64x896xf32> to vector<64x896xbf16>
    %c0_17 = arith.constant 0 : index
    %c0_18 = arith.constant 0 : index
    %26 = vector.load %arg8[%c0_17, %c0_18] : memref<64x896xbf16, #tpu.memory_space<vmem>>, vector<64x896xbf16>
    tpu.vector_store %arg8[%c0_17, %c0_18], %25 {strides = array<i32>} : memref<64x896xbf16, #tpu.memory_space<vmem>>, vector<64x896xbf16>,
    return
  }
  func.func @transform_0(%arg0: i32) -> (i32, i32) {
    %c0_i32 = arith.constant 0 : i32
    %c0_i32_0 = arith.constant 0 : i32
    return %arg0, %c0_i32 : i32, i32
  }
  func.func @transform_1(%arg0: i32) -> (i32, i32) {
    %c0_i32 = arith.constant 0 : i32
    %c0_i32_0 = arith.constant 0 : i32
    %c0_i32_1 = arith.constant 0 : i32
    return %c0_i32, %c0_i32_0 : i32, i32
  }
  func.func @transform_2(%arg0: i32) -> (i32, i32) {
    %c0_i32 = arith.constant 0 : i32
    %c0_i32_0 = arith.constant 0 : i32
    %c0_i32_1 = arith.constant 0 : i32
    return %c0_i32, %c0_i32_0 : i32, i32
  }
  func.func @transform_3(%arg0: i32) -> (i32, i32) {
    %c0_i32 = arith.constant 0 : i32
    %c0_i32_0 = arith.constant 0 : i32
    %c0_i32_1 = arith.constant 0 : i32
    return %c0_i32, %c0_i32_0 : i32, i32
  }
  func.func @transform_4(%arg0: i32) -> (i32, i32) {
    %c0_i32 = arith.constant 0 : i32
    %c0_i32_0 = arith.constant 0 : i32
    %c0_i32_1 = arith.constant 0 : i32
    return %c0_i32, %c0_i32_0 : i32, i32
  }
  func.func @transform_5(%arg0: i32) -> (i32, i32) {
    %c0_i32 = arith.constant 0 : i32
    %c0_i32_0 = arith.constant 0 : i32
    %c0_i32_1 = arith.constant 0 : i32
    return %c0_i32, %c0_i32_0 : i32, i32
  }
  func.func @transform_6(%arg0: i32) -> (i32, i32) {
    %c0_i32 = arith.constant 0 : i32
    %c0_i32_0 = arith.constant 0 : i32
    %c0_i32_1 = arith.constant 0 : i32
    return %c0_i32, %c0_i32_0 : i32, i32
  }
  func.func @transform_7(%arg0: i32) -> (i32, i32) {
    %c0_i32 = arith.constant 0 : i32
    %c0_i32_0 = arith.constant 0 : i32
    return %arg0, %c0_i32 : i32, i32
  }
}

</mosaic_0001>

<llo_original>
// kernel: tpu_custom_call.1
$region0: #{tpu_custom_call.1}
  #allocation0 [shape = 'u32[]', space=smem, size = 0x4, offset = 0x4, fixed_abs, tag = 'smem constant byte address 0x4 - core index']
  #allocation1 [shape = 'u32[144,128]{1,0:T(1,128)}', space=vmem, size = 0x12000, scoped, tag = 'internal scratch']
  %s0 = inlined_call_operand.hbm [shape: bf16[64,128], index: 0, kind: input, shape index: {}]
  %s1 = inlined_call_operand.hbm [shape: bf16[128,256], index: 1, kind: input, shape index: {}]
  %s2 = inlined_call_operand.vmem [shape: f32[1,256], index: 2, kind: input, shape index: {}]
  %s3 = inlined_call_operand.hbm [shape: bf16[256,256], index: 3, kind: input, shape index: {}]
  %s4 = inlined_call_operand.vmem [shape: f32[1,256], index: 4, kind: input, shape index: {}]
  %s5 = inlined_call_operand.hbm [shape: bf16[256,896], index: 5, kind: input, shape index: {}]
  %s6 = inlined_call_operand.vmem [shape: f32[1,896], index: 6, kind: input, shape index: {}]
  %s7 = inlined_call_operand.hbm [shape: bf16[64,896], index: 7, kind: output, shape index: {}]
  %s8 = sld [smem:[#allocation0]]
  $region54: #{tpu_custom_call.1} parent=0
    _
  %s10 = ssub.s32 1, %s8
  %s11 = scalar_select 0, %s10, %s8
  $region1: #{tpu_custom_call.1} parent=0
    #allocation2 [shape = 'u8[16384]{0}', space=vmem, size = 0x4000, scoped, tag = 'input window, operand 0, single buffered']
    #allocation3 [shape = 's32[1]{0}', space=sflag, size = 0x4, scoped, tag = 'scoped memory for tpu_custom_call.1']
    #allocation4 [shape = 's32[1]{0}', space=sflag, size = 0x4, scoped, tag = 'scoped memory for tpu_custom_call.1']
    #allocation5 [shape = 'u8[65536]{0}', space=vmem, size = 0x10000, scoped, tag = 'input window, operand 1, single buffered']
    #allocation6 [shape = 's32[1]{0}', space=sflag, size = 0x4, scoped, tag = 'scoped memory for tpu_custom_call.1']
    #allocation7 [shape = 'u8[131072]{0}', space=vmem, size = 0x20000, scoped, tag = 'input window, operand 3, single buffered']
    #allocation8 [shape = 'u8[458752]{0}', space=vmem, size = 0x70000, scoped, tag = 'input window, operand 5, single buffered']
    #allocation9 [shape = 's32[1]{0}', space=sflag, size = 0x4, scoped, tag = 'scoped memory for tpu_custom_call.1']
    #allocation10 [shape = 'u8[114688]{0}', space=vmem, size = 0x1c000, scoped, tag = 'output window, operand 0, single buffered']
    %12 = vsyncpa [#allocation3], 0
    %13 = vsyncpa [#allocation6], 0
    %14 = vsyncpa [#allocation9], 0
    %15 = vsyncpa [#allocation4], 0
    // Predicated region
    $region2: #{tpu_custom_call.1} parent=1 // pred_check
      _
    $region3: #{tpu_custom_call.1} parent=1 // pred_check_branch
      %17 = sbr.rel (0) target = $region5
    $region4: #{tpu_custom_call.1} parent=1 // pred_region
      %s19 = ssub.s32 512, 512
      %20 = vsyncadd [#allocation3], %s19
      %s21 = sshll.u32 [#allocation2], 4
      %s22 = int_to_ptr.vmem [resolvable:$true] %s21
      %27 = dma.hbm_to_vmem [thread:$0]  %s0, 512, %s22, [#allocation3], 64, 64, 4
    $region5: #{tpu_custom_call.1} parent=1 // pred_fallthru
      _
    // Predicated region
    $region6: #{tpu_custom_call.1} parent=1 // pred_check
      _
    $region7: #{tpu_custom_call.1} parent=1 // pred_check_branch
      %29 = sbr.rel (0) target = $region9
    $region8: #{tpu_custom_call.1} parent=1 // pred_region
      %s31 = ssub.s32 2048, 2048
      %32 = vsyncadd [#allocation6], %s31
      %s33 = sshll.u32 [#allocation5], 4
      %s34 = int_to_ptr.vmem [resolvable:$true] %s33
      %39 = dma.hbm_to_vmem [thread:$0]  %s1, 2048, %s34, [#allocation6], 128, 128, 8
    $region9: #{tpu_custom_call.1} parent=1 // pred_fallthru
      _
    // Predicated region
    $region10: #{tpu_custom_call.1} parent=1 // pred_check
      _
    $region11: #{tpu_custom_call.1} parent=1 // pred_check_branch
      %41 = sbr.rel (0) target = $region13
    $region12: #{tpu_custom_call.1} parent=1 // pred_region
      _
    $region13: #{tpu_custom_call.1} parent=1 // pred_fallthru
      _
    // Predicated region
    $region14: #{tpu_custom_call.1} parent=1 // pred_check
      _
    $region15: #{tpu_custom_call.1} parent=1 // pred_check_branch
      %43 = sbr.rel (0) target = $region17
    $region16: #{tpu_custom_call.1} parent=1 // pred_region
      %s45 = ssub.s32 4096, 4096
      %46 = vsyncadd [#allocation6], %s45
      %s47 = sshll.u32 [#allocation7], 4
      %s48 = int_to_ptr.vmem [resolvable:$true] %s47
      %53 = dma.hbm_to_vmem [thread:$0]  %s3, 4096, %s48, [#allocation6], 128, 128, 8
    $region17: #{tpu_custom_call.1} parent=1 // pred_fallthru
      _
    // Predicated region
    $region18: #{tpu_custom_call.1} parent=1 // pred_check
      _
    $region19: #{tpu_custom_call.1} parent=1 // pred_check_branch
      %55 = sbr.rel (0) target = $region21
    $region20: #{tpu_custom_call.1} parent=1 // pred_region
      _
    $region21: #{tpu_custom_call.1} parent=1 // pred_fallthru
      _
    // Predicated region
    $region22: #{tpu_custom_call.1} parent=1 // pred_check
      _
    $region23: #{tpu_custom_call.1} parent=1 // pred_check_branch
      %57 = sbr.rel (0) target = $region25
    $region24: #{tpu_custom_call.1} parent=1 // pred_region
      %s59 = ssub.s32 14336, 14336
      %60 = vsyncadd [#allocation9], %s59
      %s61 = sshll.u32 [#allocation8], 4
      %s62 = int_to_ptr.vmem [resolvable:$true] %s61
      %67 = dma.hbm_to_vmem [thread:$0]  %s5, 14336, %s62, [#allocation9], 448, 448, 28
    $region25: #{tpu_custom_call.1} parent=1 // pred_fallthru
      _
    // Predicated region
    $region26: #{tpu_custom_call.1} parent=1 // pred_check
      _
    $region27: #{tpu_custom_call.1} parent=1 // pred_check_branch
      %69 = sbr.rel (0) target = $region29
    $region28: #{tpu_custom_call.1} parent=1 // pred_region
      _
    $region29: #{tpu_custom_call.1} parent=1 // pred_fallthru
      _
    // Predicated region
    $region30: #{tpu_custom_call.1} parent=1 // pred_check
      _
    $region31: #{tpu_custom_call.1} parent=1 // pred_check_branch
      %71 = sbr.rel (0) target = $region33
    $region32: #{tpu_custom_call.1} parent=1 // pred_region
      %72 = dma.done [#allocation3], 512
    $region33: #{tpu_custom_call.1} parent=1 // pred_fallthru
      _
    // Predicated region
    $region34: #{tpu_custom_call.1} parent=1 // pred_check
      _
    $region35: #{tpu_custom_call.1} parent=1 // pred_check_branch
      %74 = sbr.rel (0) target = $region37
    $region36: #{tpu_custom_call.1} parent=1 // pred_region
      %75 = dma.done [#allocation6], 2048
    $region37: #{tpu_custom_call.1} parent=1 // pred_fallthru
      _
    // Predicated region
    $region38: #{tpu_custom_call.1} parent=1 // pred_check
      _
    $region39: #{tpu_custom_call.1} parent=1 // pred_check_branch
      %77 = sbr.rel (0) target = $region41
    $region40: #{tpu_custom_call.1} parent=1 // pred_region
      %78 = dma.done [#allocation6], 4096
    $region41: #{tpu_custom_call.1} parent=1 // pred_fallthru
      _
    // Predicated region
    $region42: #{tpu_custom_call.1} parent=1 // pred_check
      _
    $region43: #{tpu_custom_call.1} parent=1 // pred_check_branch
      %80 = sbr.rel (0) target = $region45
    $region44: #{tpu_custom_call.1} parent=1 // pred_region
      %81 = dma.done [#allocation9], 14336
    $region45: #{tpu_custom_call.1} parent=1 // pred_fallthru
      _
    %v83 = vld [vmem:[#allocation2] sm:$0xf]
    %v84 = vld [vmem:[#allocation2 + $0x4] sm:$0xf]
    %v85 = vld [vmem:[#allocation2 + $0x8] sm:$0xf]
    %v86 = vld [vmem:[#allocation2 + $0xc] sm:$0xf]
    %v87 = vld [vmem:[#allocation2 + $0x10] sm:$0xf]
    %v88 = vld [vmem:[#allocation2 + $0x14] sm:$0xf]
    %v89 = vld [vmem:[#allocation2 + $0x18] sm:$0xf]
    %v90 = vld [vmem:[#allocation2 + $0x1c] sm:$0xf]
    %v91 = vld [vmem:[#allocation5] sm:$0xff]
    %v92 = vld [vmem:[#allocation5 + $0x8] sm:$0xff]
    %v93 = vld [vmem:[#allocation5 + $0x10] sm:$0xff]
    %v94 = vld [vmem:[#allocation5 + $0x18] sm:$0xff]
    %v95 = vld [vmem:[#allocation5 + $0x20] sm:$0xff]
    %v96 = vld [vmem:[#allocation5 + $0x28] sm:$0xff]
    %v97 = vld [vmem:[#allocation5 + $0x30] sm:$0xff]
    %v98 = vld [vmem:[#allocation5 + $0x38] sm:$0xff]
    %v99 = vld [vmem:[#allocation5 + $0x40] sm:$0xff]
    %v100 = vld [vmem:[#allocation5 + $0x48] sm:$0xff]
    %v101 = vld [vmem:[#allocation5 + $0x50] sm:$0xff]
    %v102 = vld [vmem:[#allocation5 + $0x58] sm:$0xff]
    %v103 = vld [vmem:[#allocation5 + $0x60] sm:$0xff]
    %v104 = vld [vmem:[#allocation5 + $0x68] sm:$0xff]
    %v105 = vld [vmem:[#allocation5 + $0x70] sm:$0xff]
    %v106 = vld [vmem:[#allocation5 + $0x78] sm:$0xff]
    %v107 = vld [vmem:[%s2] sm:$0x3]
    %v109 = vlaneseq
    %v110 = vshrl.u32 %v109, 7
    %v111 = vsub.s32 0, %v110
    %v112 = vrot.slane %v107, %v111
    %v113 = vlaneseq
    %v114 = vshrl.u32 %v113, 7
    %v115 = vsub.s32 1, %v114
    %v116 = vrot.slane %v107, %v115
    %v127 = vunpack.c.l.b16 %v83
    %v128 = vunpack.c.l.b16 %v84
    %v129 = vunpack.c.l.b16 %v85
    %v130 = vunpack.c.l.b16 %v86
    %v131 = vunpack.c.l.b16 %v87
    %v132 = vunpack.c.l.b16 %v88
    %v133 = vunpack.c.l.b16 %v89
    %v134 = vunpack.c.l.b16 %v90
    %v135 = vpack.c.b16 %v128, %v127
    %v136 = vpack.c.b16 %v130, %v129
    %v137 = vpack.c.b16 %v132, %v131
    %v138 = vpack.c.b16 %v134, %v133
    %v159 = vunpack.c.l.b16 %v91
    %v160 = vunpack.c.h.b16 %v91
    %v161 = vunpack.c.l.b16 %v92
    %v162 = vunpack.c.h.b16 %v92
    %v163 = vunpack.c.l.b16 %v93
    %v164 = vunpack.c.h.b16 %v93
    %v165 = vunpack.c.l.b16 %v94
    %v166 = vunpack.c.h.b16 %v94
    %v167 = vunpack.c.l.b16 %v95
    %v168 = vunpack.c.h.b16 %v95
    %v169 = vunpack.c.l.b16 %v96
    %v170 = vunpack.c.h.b16 %v96
    %v171 = vunpack.c.l.b16 %v97
    %v172 = vunpack.c.h.b16 %v97
    %v173 = vunpack.c.l.b16 %v98
    %v174 = vunpack.c.h.b16 %v98
    %v175 = vunpack.c.l.b16 %v99
    %v176 = vunpack.c.h.b16 %v99
    %v177 = vunpack.c.l.b16 %v100
    %v178 = vunpack.c.h.b16 %v100
    %v179 = vunpack.c.l.b16 %v101
    %v180 = vunpack.c.h.b16 %v101
    %v181 = vunpack.c.l.b16 %v102
    %v182 = vunpack.c.h.b16 %v102
    %v183 = vunpack.c.l.b16 %v103
    %v184 = vunpack.c.h.b16 %v103
    %v185 = vunpack.c.l.b16 %v104
    %v186 = vunpack.c.h.b16 %v104
    %v187 = vunpack.c.l.b16 %v105
    %v188 = vunpack.c.h.b16 %v105
    %v189 = vunpack.c.l.b16 %v106
    %v190 = vunpack.c.h.b16 %v106
    %v191 = vpack.c.b16 %v161, %v159
    %v192 = vpack.c.b16 %v162, %v160
    %v193 = vpack.c.b16 %v165, %v163
    %v194 = vpack.c.b16 %v166, %v164
    %v195 = vpack.c.b16 %v169, %v167
    %v196 = vpack.c.b16 %v170, %v168
    %v197 = vpack.c.b16 %v173, %v171
    %v198 = vpack.c.b16 %v174, %v172
    %v199 = vpack.c.b16 %v177, %v175
    %v200 = vpack.c.b16 %v178, %v176
    %v201 = vpack.c.b16 %v181, %v179
    %v202 = vpack.c.b16 %v182, %v180
    %v203 = vpack.c.b16 %v185, %v183
    %v204 = vpack.c.b16 %v186, %v184
    %v205 = vpack.c.b16 %v189, %v187
    %v206 = vpack.c.b16 %v190, %v188
    %223 = vmatprep.subr.bf16.mxu0 %v192
    %224 = vmatpush1.bf16.msra.mxu0 %v191
    %225 = vmatprep.subr.bf16.mxu0 %v194
    %226 = vmatpush1.bf16.msra.mxu0 %v193
    %227 = vmatprep.subr.bf16.mxu0 %v196
    %228 = vmatpush1.bf16.msra.mxu0 %v195
    %229 = vmatprep.subr.bf16.mxu0 %v198
    %230 = vmatpush1.bf16.msra.mxu0 %v197
    %231 = vmatprep.subr.bf16.mxu0 %v200
    %232 = vmatpush1.bf16.msra.mxu0 %v199
    %233 = vmatprep.subr.bf16.mxu0 %v202
    %234 = vmatpush1.bf16.msra.mxu0 %v201
    %235 = vmatprep.subr.bf16.mxu0 %v204
    %236 = vmatpush1.bf16.msra.mxu0 %v203
    %237 = vmatprep.subr.bf16.mxu0 %v206
    %238 = vmatpush1.bf16.msra.mxu0 %v205
    %239 = vmatprep.subr.bf16.mxu0 0
    %240 = vmatpush1.bf16.msra.mxu0 0
    %241 = vmatprep.subr.bf16.mxu0 0
    %242 = vmatpush1.bf16.msra.mxu0 0
    %243 = vmatprep.subr.bf16.mxu0 0
    %244 = vmatpush1.bf16.msra.mxu0 0
    %245 = vmatprep.subr.bf16.mxu0 0
    %246 = vmatpush1.bf16.msra.mxu0 0
    %247 = vmatprep.subr.bf16.mxu0 0
    %248 = vmatpush1.bf16.msra.mxu0 0
    %249 = vmatprep.subr.bf16.mxu0 0
    %250 = vmatpush1.bf16.msra.mxu0 0
    %251 = vmatprep.subr.bf16.mxu0 0
    %252 = vmatpush1.bf16.msra.mxu0 0
    %253 = vmatprep.subr.bf16.mxu0 0
    %254 = vmatpush1.bf16.msra.mxu0 0
    %255 = vmatprep.mubr.bf16.mxu0 0
    %256 = vmatmul.mubr.bf16.gmra.mrb[0].mxu0 %v135
    %v257 = vpop.f32.mrb[0].mxu0
    %v258 = vadd.f32 %v112, %v257
    %v259 = vpop.f32.mrb[0].mxu0
    %v260 = vadd.f32 %v116, %v259
    %v261 = vpop.f32.mrb[0].mxu0
    %v262 = vadd.f32 %v112, %v261
    %v263 = vpop.f32.mrb[0].mxu0
    %v264 = vadd.f32 %v116, %v263
    %265 = vmatprep.mubr.bf16.mxu0 0
    %266 = vmatmul.mubr.bf16.gmra.mrb[0].mxu0 %v136
    %v267 = vpop.f32.mrb[0].mxu0
    %v268 = vadd.f32 %v112, %v267
    %v269 = vpop.f32.mrb[0].mxu0
    %v270 = vadd.f32 %v116, %v269
    %v271 = vpop.f32.mrb[0].mxu0
    %v272 = vadd.f32 %v112, %v271
    %v273 = vpop.f32.mrb[0].mxu0
    %v274 = vadd.f32 %v116, %v273
    %275 = vmatprep.mubr.bf16.mxu0 0
    %276 = vmatmul.mubr.bf16.gmra.mrb[0].mxu0 %v137
    %v277 = vpop.f32.mrb[0].mxu0
    %v278 = vadd.f32 %v112, %v277
    %v279 = vpop.f32.mrb[0].mxu0
    %v280 = vadd.f32 %v116, %v279
    %v281 = vpop.f32.mrb[0].mxu0
    %v282 = vadd.f32 %v112, %v281
    %v283 = vpop.f32.mrb[0].mxu0
    %v284 = vadd.f32 %v116, %v283
    %285 = vmatprep.mubr.bf16.mxu0 0
    %286 = vmatmul.mubr.bf16.gmra.mrb[0].mxu0 %v138
    %v287 = vpop.f32.mrb[0].mxu0
    %v288 = vadd.f32 %v112, %v287
    %v289 = vpop.f32.mrb[0].mxu0
    %v290 = vadd.f32 %v116, %v289
    %v291 = vpop.f32.mrb[0].mxu0
    %v292 = vadd.f32 %v112, %v291
    %v293 = vpop.f32.mrb[0].mxu0
    %v294 = vadd.f32 %v116, %v293
    %295 = vdwg.mxu0
    %v296 = vmul.f32 %v258, 0.2
    %v297 = vmul.f32 %v260, 0.2
    %v298 = vmul.f32 %v262, 0.2
    %v299 = vmul.f32 %v264, 0.2
    %v300 = vmul.f32 %v268, 0.2
    %v301 = vmul.f32 %v270, 0.2
    %v302 = vmul.f32 %v272, 0.2
    %v303 = vmul.f32 %v274, 0.2
    %v304 = vmul.f32 %v278, 0.2
    %v305 = vmul.f32 %v280, 0.2
    %v306 = vmul.f32 %v282, 0.2
    %v307 = vmul.f32 %v284, 0.2
    %v308 = vmul.f32 %v288, 0.2
    %v309 = vmul.f32 %v290, 0.2
    %v310 = vmul.f32 %v292, 0.2
    %v311 = vmul.f32 %v294, 0.2
    %v312 = vmax.f32 %v258, %v296
    %v313 = vmax.f32 %v260, %v297
    %v314 = vmax.f32 %v262, %v298
    %v315 = vmax.f32 %v264, %v299
    %v316 = vmax.f32 %v268, %v300
    %v317 = vmax.f32 %v270, %v301
    %v318 = vmax.f32 %v272, %v302
    %v319 = vmax.f32 %v274, %v303
    %v320 = vmax.f32 %v278, %v304
    %v321 = vmax.f32 %v280, %v305
    %v322 = vmax.f32 %v282, %v306
    %v323 = vmax.f32 %v284, %v307
    %v324 = vmax.f32 %v288, %v308
    %v325 = vmax.f32 %v290, %v309
    %v326 = vmax.f32 %v292, %v310
    %v327 = vmax.f32 %v294, %v311
    %v328 = vpack.c.bf16 %v314, %v312
    %v329 = vpack.c.bf16 %v315, %v313
    %v330 = vpack.c.bf16 %v318, %v316
    %v331 = vpack.c.bf16 %v319, %v317
    %v332 = vpack.c.bf16 %v322, %v320
    %v333 = vpack.c.bf16 %v323, %v321
    %v334 = vpack.c.bf16 %v326, %v324
    %v335 = vpack.c.bf16 %v327, %v325
    %v336 = vld [vmem:[#allocation7] sm:$0xff]
    %v337 = vld [vmem:[#allocation7 + $0x8] sm:$0xff]
    %v338 = vld [vmem:[#allocation7 + $0x10] sm:$0xff]
    %v339 = vld [vmem:[#allocation7 + $0x18] sm:$0xff]
    %v340 = vld [vmem:[#allocation7 + $0x20] sm:$0xff]
    %v341 = vld [vmem:[#allocation7 + $0x28] sm:$0xff]
    %v342 = vld [vmem:[#allocation7 + $0x30] sm:$0xff]
    %v343 = vld [vmem:[#allocation7 + $0x38] sm:$0xff]
    %v344 = vld [vmem:[#allocation7 + $0x40] sm:$0xff]
    %v345 = vld [vmem:[#allocation7 + $0x48] sm:$0xff]
    %v346 = vld [vmem:[#allocation7 + $0x50] sm:$0xff]
    %v347 = vld [vmem:[#allocation7 + $0x58] sm:$0xff]
    %v348 = vld [vmem:[#allocation7 + $0x60] sm:$0xff]
    %v349 = vld [vmem:[#allocation7 + $0x68] sm:$0xff]
    %v350 = vld [vmem:[#allocation7 + $0x70] sm:$0xff]
    %v351 = vld [vmem:[#allocation7 + $0x78] sm:$0xff]
    %v352 = vld [vmem:[#allocation7 + $0x80] sm:$0xff]
    %v353 = vld [vmem:[#allocation7 + $0x88] sm:$0xff]
    %v354 = vld [vmem:[#allocation7 + $0x90] sm:$0xff]
    %v355 = vld [vmem:[#allocation7 + $0x98] sm:$0xff]
    %v356 = vld [vmem:[#allocation7 + $0xa0] sm:$0xff]
    %v357 = vld [vmem:[#allocation7 + $0xa8] sm:$0xff]
    %v358 = vld [vmem:[#allocation7 + $0xb0] sm:$0xff]
    %v359 = vld [vmem:[#allocation7 + $0xb8] sm:$0xff]
    %v360 = vld [vmem:[#allocation7 + $0xc0] sm:$0xff]
    %v361 = vld [vmem:[#allocation7 + $0xc8] sm:$0xff]
    %v362 = vld [vmem:[#allocation7 + $0xd0] sm:$0xff]
    %v363 = vld [vmem:[#allocation7 + $0xd8] sm:$0xff]
    %v364 = vld [vmem:[#allocation7 + $0xe0] sm:$0xff]
    %v365 = vld [vmem:[#allocation7 + $0xe8] sm:$0xff]
    %v366 = vld [vmem:[#allocation7 + $0xf0] sm:$0xff]
    %v367 = vld [vmem:[#allocation7 + $0xf8] sm:$0xff]
    %v368 = vld [vmem:[%s4] sm:$0x3]
    %v370 = vlaneseq
    %v371 = vshrl.u32 %v370, 7
    %v372 = vsub.s32 0, %v371
    %v373 = vrot.slane %v368, %v372
    %v374 = vlaneseq
    %v375 = vshrl.u32 %v374, 7
    %v376 = vsub.s32 1, %v375
    %v377 = vrot.slane %v368, %v376
    %v412 = vunpack.c.l.b16 %v336
    %v413 = vunpack.c.h.b16 %v336
    %v414 = vunpack.c.l.b16 %v337
    %v415 = vunpack.c.h.b16 %v337
    %v416 = vunpack.c.l.b16 %v338
    %v417 = vunpack.c.h.b16 %v338
    %v418 = vunpack.c.l.b16 %v339
    %v419 = vunpack.c.h.b16 %v339
    %v420 = vunpack.c.l.b16 %v340
    %v421 = vunpack.c.h.b16 %v340
    %v422 = vunpack.c.l.b16 %v341
    %v423 = vunpack.c.h.b16 %v341
    %v424 = vunpack.c.l.b16 %v342
    %v425 = vunpack.c.h.b16 %v342
    %v426 = vunpack.c.l.b16 %v343
    %v427 = vunpack.c.h.b16 %v343
    %v428 = vunpack.c.l.b16 %v344
    %v429 = vunpack.c.h.b16 %v344
    %v430 = vunpack.c.l.b16 %v345
    %v431 = vunpack.c.h.b16 %v345
    %v432 = vunpack.c.l.b16 %v346
    %v433 = vunpack.c.h.b16 %v346
    %v434 = vunpack.c.l.b16 %v347
    %v435 = vunpack.c.h.b16 %v347
    %v436 = vunpack.c.l.b16 %v348
    %v437 = vunpack.c.h.b16 %v348
    %v438 = vunpack.c.l.b16 %v349
    %v439 = vunpack.c.h.b16 %v349
    %v440 = vunpack.c.l.b16 %v350
    %v441 = vunpack.c.h.b16 %v350
    %v442 = vunpack.c.l.b16 %v351
    %v443 = vunpack.c.h.b16 %v351
    %v444 = vunpack.c.l.b16 %v352
    %v445 = vunpack.c.h.b16 %v352
    %v446 = vunpack.c.l.b16 %v353
    %v447 = vunpack.c.h.b16 %v353
    %v448 = vunpack.c.l.b16 %v354
    %v449 = vunpack.c.h.b16 %v354
    %v450 = vunpack.c.l.b16 %v355
    %v451 = vunpack.c.h.b16 %v355
    %v452 = vunpack.c.l.b16 %v356
    %v453 = vunpack.c.h.b16 %v356
    %v454 = vunpack.c.l.b16 %v357
    %v455 = vunpack.c.h.b16 %v357
    %v456 = vunpack.c.l.b16 %v358
    %v457 = vunpack.c.h.b16 %v358
    %v458 = vunpack.c.l.b16 %v359
    %v459 = vunpack.c.h.b16 %v359
    %v460 = vunpack.c.l.b16 %v360
    %v461 = vunpack.c.h.b16 %v360
    %v462 = vunpack.c.l.b16 %v361
    %v463 = vunpack.c.h.b16 %v361
    %v464 = vunpack.c.l.b16 %v362
    %v465 = vunpack.c.h.b16 %v362
    %v466 = vunpack.c.l.b16 %v363
    %v467 = vunpack.c.h.b16 %v363
    %v468 = vunpack.c.l.b16 %v364
    %v469 = vunpack.c.h.b16 %v364
    %v470 = vunpack.c.l.b16 %v365
    %v471 = vunpack.c.h.b16 %v365
    %v472 = vunpack.c.l.b16 %v366
    %v473 = vunpack.c.h.b16 %v366
    %v474 = vunpack.c.l.b16 %v367
    %v475 = vunpack.c.h.b16 %v367
    %v476 = vpack.c.b16 %v414, %v412
    %v477 = vpack.c.b16 %v415, %v413
    %v478 = vpack.c.b16 %v418, %v416
    %v479 = vpack.c.b16 %v419, %v417
    %v480 = vpack.c.b16 %v422, %v420
    %v481 = vpack.c.b16 %v423, %v421
    %v482 = vpack.c.b16 %v426, %v424
    %v483 = vpack.c.b16 %v427, %v425
    %v484 = vpack.c.b16 %v430, %v428
    %v485 = vpack.c.b16 %v431, %v429
    %v486 = vpack.c.b16 %v434, %v432
    %v487 = vpack.c.b16 %v435, %v433
    %v488 = vpack.c.b16 %v438, %v436
    %v489 = vpack.c.b16 %v439, %v437
    %v490 = vpack.c.b16 %v442, %v440
    %v491 = vpack.c.b16 %v443, %v441
    %v492 = vpack.c.b16 %v446, %v444
    %v493 = vpack.c.b16 %v447, %v445
    %v494 = vpack.c.b16 %v450, %v448
    %v495 = vpack.c.b16 %v451, %v449
    %v496 = vpack.c.b16 %v454, %v452
    %v497 = vpack.c.b16 %v455, %v453
    %v498 = vpack.c.b16 %v458, %v456
    %v499 = vpack.c.b16 %v459, %v457
    %v500 = vpack.c.b16 %v462, %v460
    %v501 = vpack.c.b16 %v463, %v461
    %v502 = vpack.c.b16 %v466, %v464
    %v503 = vpack.c.b16 %v467, %v465
    %v504 = vpack.c.b16 %v470, %v468
    %v505 = vpack.c.b16 %v471, %v469
    %v506 = vpack.c.b16 %v474, %v472
    %v507 = vpack.c.b16 %v475, %v473
    %540 = vmatprep.subr.bf16.mxu0 %v477
    %541 = vmatpush1.bf16.msra.mxu0 %v476
    %542 = vmatprep.subr.bf16.mxu0 %v479
    %543 = vmatpush1.bf16.msra.mxu0 %v478
    %544 = vmatprep.subr.bf16.mxu0 %v481
    %545 = vmatpush1.bf16.msra.mxu0 %v480
    %546 = vmatprep.subr.bf16.mxu0 %v483
    %547 = vmatpush1.bf16.msra.mxu0 %v482
    %548 = vmatprep.subr.bf16.mxu0 %v485
    %549 = vmatpush1.bf16.msra.mxu0 %v484
    %550 = vmatprep.subr.bf16.mxu0 %v487
    %551 = vmatpush1.bf16.msra.mxu0 %v486
    %552 = vmatprep.subr.bf16.mxu0 %v489
    %553 = vmatpush1.bf16.msra.mxu0 %v488
    %554 = vmatprep.subr.bf16.mxu0 %v491
    %555 = vmatpush1.bf16.msra.mxu0 %v490
    %556 = vmatprep.subr.bf16.mxu0 %v493
    %557 = vmatpush1.bf16.msra.mxu0 %v492
    %558 = vmatprep.subr.bf16.mxu0 %v495
    %559 = vmatpush1.bf16.msra.mxu0 %v494
    %560 = vmatprep.subr.bf16.mxu0 %v497
    %561 = vmatpush1.bf16.msra.mxu0 %v496
    %562 = vmatprep.subr.bf16.mxu0 %v499
    %563 = vmatpush1.bf16.msra.mxu0 %v498
    %564 = vmatprep.subr.bf16.mxu0 %v501
    %565 = vmatpush1.bf16.msra.mxu0 %v500
    %566 = vmatprep.subr.bf16.mxu0 %v503
    %567 = vmatpush1.bf16.msra.mxu0 %v502
    %568 = vmatprep.subr.bf16.mxu0 %v505
    %569 = vmatpush1.bf16.msra.mxu0 %v504
    %570 = vmatprep.subr.bf16.mxu0 %v507
    %571 = vmatpush1.bf16.msra.mxu0 %v506
    %572 = vmatprep.mubr.bf16.mxu0 %v329
    %573 = vmatmul.mubr.bf16.gmra.mrb[0].mxu0 %v328
    %v574 = vpop.f32.mrb[0].mxu0
    %v575 = vadd.f32 %v373, %v574
    %v576 = vpop.f32.mrb[0].mxu0
    %v577 = vadd.f32 %v377, %v576
    %v578 = vpop.f32.mrb[0].mxu0
    %v579 = vadd.f32 %v373, %v578
    %v580 = vpop.f32.mrb[0].mxu0
    %v581 = vadd.f32 %v377, %v580
    %582 = vmatprep.mubr.bf16.mxu0 %v331
    %583 = vmatmul.mubr.bf16.gmra.mrb[0].mxu0 %v330
    %v584 = vpop.f32.mrb[0].mxu0
    %v585 = vadd.f32 %v373, %v584
    %v586 = vpop.f32.mrb[0].mxu0
    %v587 = vadd.f32 %v377, %v586
    %v588 = vpop.f32.mrb[0].mxu0
    %v589 = vadd.f32 %v373, %v588
    %v590 = vpop.f32.mrb[0].mxu0
    %v591 = vadd.f32 %v377, %v590
    %592 = vmatprep.mubr.bf16.mxu0 %v333
    %593 = vmatmul.mubr.bf16.gmra.mrb[0].mxu0 %v332
    %v594 = vpop.f32.mrb[0].mxu0
    %v595 = vadd.f32 %v373, %v594
    %v596 = vpop.f32.mrb[0].mxu0
    %v597 = vadd.f32 %v377, %v596
    %v598 = vpop.f32.mrb[0].mxu0
    %v599 = vadd.f32 %v373, %v598
    %v600 = vpop.f32.mrb[0].mxu0
    %v601 = vadd.f32 %v377, %v600
    %602 = vmatprep.mubr.bf16.mxu0 %v335
    %603 = vmatmul.mubr.bf16.gmra.mrb[0].mxu0 %v334
    %v604 = vpop.f32.mrb[0].mxu0
    %v605 = vadd.f32 %v373, %v604
    %v606 = vpop.f32.mrb[0].mxu0
    %v607 = vadd.f32 %v377, %v606
    %v608 = vpop.f32.mrb[0].mxu0
    %v609 = vadd.f32 %v373, %v608
    %v610 = vpop.f32.mrb[0].mxu0
    %v611 = vadd.f32 %v377, %v610
    %612 = vdwg.mxu0
    %v613 = vmul.f32 %v575, 0.2
    %v614 = vmul.f32 %v577, 0.2
    %v615 = vmul.f32 %v579, 0.2
    %v616 = vmul.f32 %v581, 0.2
    %v617 = vmul.f32 %v585, 0.2
    %v618 = vmul.f32 %v587, 0.2
    %v619 = vmul.f32 %v589, 0.2
    %v620 = vmul.f32 %v591, 0.2
    %v621 = vmul.f32 %v595, 0.2
    %v622 = vmul.f32 %v597, 0.2
    %v623 = vmul.f32 %v599, 0.2
    %v624 = vmul.f32 %v601, 0.2
    %v625 = vmul.f32 %v605, 0.2
    %v626 = vmul.f32 %v607, 0.2
    %v627 = vmul.f32 %v609, 0.2
    %v628 = vmul.f32 %v611, 0.2
    %v629 = vmax.f32 %v575, %v613
    %v630 = vmax.f32 %v577, %v614
    %v631 = vmax.f32 %v579, %v615
    %v632 = vmax.f32 %v581, %v616
    %v633 = vmax.f32 %v585, %v617
    %v634 = vmax.f32 %v587, %v618
    %v635 = vmax.f32 %v589, %v619
    %v636 = vmax.f32 %v591, %v620
    %v637 = vmax.f32 %v595, %v621
    %v638 = vmax.f32 %v597, %v622
    %v639 = vmax.f32 %v599, %v623
    %v640 = vmax.f32 %v601, %v624
    %v641 = vmax.f32 %v605, %v625
    %v642 = vmax.f32 %v607, %v626
    %v643 = vmax.f32 %v609, %v627
    %v644 = vmax.f32 %v611, %v628
    %v645 = vpack.c.bf16 %v631, %v629
    %v646 = vpack.c.bf16 %v632, %v630
    %v647 = vpack.c.bf16 %v635, %v633
    %v648 = vpack.c.bf16 %v636, %v634
    %v649 = vpack.c.bf16 %v639, %v637
    %v650 = vpack.c.bf16 %v640, %v638
    %v651 = vpack.c.bf16 %v643, %v641
    %v652 = vpack.c.bf16 %v644, %v642
    %v653 = vld [vmem:[#allocation8] sm:$0xff]
    %v654 = vld [vmem:[#allocation8 + $0x8] sm:$0xff]
    %v655 = vld [vmem:[#allocation8 + $0x10] sm:$0xff]
    %v656 = vld [vmem:[#allocation8 + $0x18] sm:$0xf]
    %v657 = vld [vmem:[#allocation8 + $0x1c] sm:$0xff]
    %v658 = vld [vmem:[#allocation8 + $0x24] sm:$0xff]
    %v659 = vld [vmem:[#allocation8 + $0x2c] sm:$0xff]
    %v660 = vld [vmem:[#allocation8 + $0x34] sm:$0xf]
    %v661 = vld [vmem:[#allocation8 + $0x38] sm:$0xff]
    %v662 = vld [vmem:[#allocation8 + $0x40] sm:$0xff]
    %v663 = vld [vmem:[#allocation8 + $0x48] sm:$0xff]
    %v664 = vld [vmem:[#allocation8 + $0x50] sm:$0xf]
    %v665 = vld [vmem:[#allocation8 + $0x54] sm:$0xff]
    %v666 = vld [vmem:[#allocation8 + $0x5c] sm:$0xff]
    %v667 = vld [vmem:[#allocation8 + $0x64] sm:$0xff]
    %v668 = vld [vmem:[#allocation8 + $0x6c] sm:$0xf]
    %v669 = vld [vmem:[#allocation8 + $0x70] sm:$0xff]
    %v670 = vld [vmem:[#allocation8 + $0x78] sm:$0xff]
    %v671 = vld [vmem:[#allocation8 + $0x80] sm:$0xff]
    %v672 = vld [vmem:[#allocation8 + $0x88] sm:$0xf]
    %v673 = vld [vmem:[#allocation8 + $0x8c] sm:$0xff]
    %v674 = vld [vmem:[#allocation8 + $0x94] sm:$0xff]
    %v675 = vld [vmem:[#allocation8 + $0x9c] sm:$0xff]
    %v676 = vld [vmem:[#allocation8 + $0xa4] sm:$0xf]
    %v677 = vld [vmem:[#allocation8 + $0xa8] sm:$0xff]
    %v678 = vld [vmem:[#allocation8 + $0xb0] sm:$0xff]
    %v679 = vld [vmem:[#allocation8 + $0xb8] sm:$0xff]
    %v680 = vld [vmem:[#allocation8 + $0xc0] sm:$0xf]
    %v681 = vld [vmem:[#allocation8 + $0xc4] sm:$0xff]
    %v682 = vld [vmem:[#allocation8 + $0xcc] sm:$0xff]
    %v683 = vld [vmem:[#allocation8 + $0xd4] sm:$0xff]
    %v684 = vld [vmem:[#allocation8 + $0xdc] sm:$0xf]
    %v685 = vld [vmem:[#allocation8 + $0xe0] sm:$0xff]
    %v686 = vld [vmem:[#allocation8 + $0xe8] sm:$0xff]
    %v687 = vld [vmem:[#allocation8 + $0xf0] sm:$0xff]
    %v688 = vld [vmem:[#allocation8 + $0xf8] sm:$0xf]
    %v689 = vld [vmem:[#allocation8 + $0xfc] sm:$0xff]
    %v690 = vld [vmem:[#allocation8 + $0x104] sm:$0xff]
    %v691 = vld [vmem:[#allocation8 + $0x10c] sm:$0xff]
    %v692 = vld [vmem:[#allocation8 + $0x114] sm:$0xf]
    %v693 = vld [vmem:[#allocation8 + $0x118] sm:$0xff]
    %v694 = vld [vmem:[#allocation8 + $0x120] sm:$0xff]
    %v695 = vld [vmem:[#allocation8 + $0x128] sm:$0xff]
    %v696 = vld [vmem:[#allocation8 + $0x130] sm:$0xf]
    %v697 = vld [vmem:[#allocation8 + $0x134] sm:$0xff]
    %v698 = vld [vmem:[#allocation8 + $0x13c] sm:$0xff]
    %v699 = vld [vmem:[#allocation8 + $0x144] sm:$0xff]
    %v700 = vld [vmem:[#allocation8 + $0x14c] sm:$0xf]
    %v701 = vld [vmem:[#allocation8 + $0x150] sm:$0xff]
    %v702 = vld [vmem:[#allocation8 + $0x158] sm:$0xff]
    %v703 = vld [vmem:[#allocation8 + $0x160] sm:$0xff]
    %v704 = vld [vmem:[#allocation8 + $0x168] sm:$0xf]
    %v705 = vld [vmem:[#allocation8 + $0x16c] sm:$0xff]
    %v706 = vld [vmem:[#allocation8 + $0x174] sm:$0xff]
    %v707 = vld [vmem:[#allocation8 + $0x17c] sm:$0xff]
    %v708 = vld [vmem:[#allocation8 + $0x184] sm:$0xf]
    %v709 = vld [vmem:[#allocation8 + $0x188] sm:$0xff]
    %v710 = vld [vmem:[#allocation8 + $0x190] sm:$0xff]
    %v711 = vld [vmem:[#allocation8 + $0x198] sm:$0xff]
    %v712 = vld [vmem:[#allocation8 + $0x1a0] sm:$0xf]
    %v713 = vld [vmem:[#allocation8 + $0x1a4] sm:$0xff]
    %v714 = vld [vmem:[#allocation8 + $0x1ac] sm:$0xff]
    %v715 = vld [vmem:[#allocation8 + $0x1b4] sm:$0xff]
    %v716 = vld [vmem:[#allocation8 + $0x1bc] sm:$0xf]
    %v717 = vld [vmem:[#allocation8 + $0x1c0] sm:$0xff]
    %v718 = vld [vmem:[#allocation8 + $0x1c8] sm:$0xff]
    %v719 = vld [vmem:[#allocation8 + $0x1d0] sm:$0xff]
    %v720 = vld [vmem:[#allocation8 + $0x1d8] sm:$0xf]
    %v721 = vld [vmem:[#allocation8 + $0x1dc] sm:$0xff]
    %v722 = vld [vmem:[#allocation8 + $0x1e4] sm:$0xff]
    %v723 = vld [vmem:[#allocation8 + $0x1ec] sm:$0xff]
    %v724 = vld [vmem:[#allocation8 + $0x1f4] sm:$0xf]
    %v725 = vld [vmem:[#allocation8 + $0x1f8] sm:$0xff]
    %v726 = vld [vmem:[#allocation8 + $0x200] sm:$0xff]
    %v727 = vld [vmem:[#allocation8 + $0x208] sm:$0xff]
    %v728 = vld [vmem:[#allocation8 + $0x210] sm:$0xf]
    %v729 = vld [vmem:[#allocation8 + $0x214] sm:$0xff]
    %v730 = vld [vmem:[#allocation8 + $0x21c] sm:$0xff]
    %v731 = vld [vmem:[#allocation8 + $0x224] sm:$0xff]
    %v732 = vld [vmem:[#allocation8 + $0x22c] sm:$0xf]
    %v733 = vld [vmem:[#allocation8 + $0x230] sm:$0xff]
    %v734 = vld [vmem:[#allocation8 + $0x238] sm:$0xff]
    %v735 = vld [vmem:[#allocation8 + $0x240] sm:$0xff]
    %v736 = vld [vmem:[#allocation8 + $0x248] sm:$0xf]
    %v737 = vld [vmem:[#allocation8 + $0x24c] sm:$0xff]
    %v738 = vld [vmem:[#allocation8 + $0x254] sm:$0xff]
    %v739 = vld [vmem:[#allocation8 + $0x25c] sm:$0xff]
    %v740 = vld [vmem:[#allocation8 + $0x264] sm:$0xf]
    %v741 = vld [vmem:[#allocation8 + $0x268] sm:$0xff]
    %v742 = vld [vmem:[#allocation8 + $0x270] sm:$0xff]
    %v743 = vld [vmem:[#allocation8 + $0x278] sm:$0xff]
    %v744 = vld [vmem:[#allocation8 + $0x280] sm:$0xf]
    %v745 = vld [vmem:[#allocation8 + $0x284] sm:$0xff]
    %v746 = vld [vmem:[#allocation8 + $0x28c] sm:$0xff]
    %v747 = vld [vmem:[#allocation8 + $0x294] sm:$0xff]
    %v748 = vld [vmem:[#allocation8 + $0x29c] sm:$0xf]
    %v749 = vld [vmem:[#allocation8 + $0x2a0] sm:$0xff]
    %v750 = vld [vmem:[#allocation8 + $0x2a8] sm:$0xff]
    %v751 = vld [vmem:[#allocation8 + $0x2b0] sm:$0xff]
    %v752 = vld [vmem:[#allocation8 + $0x2b8] sm:$0xf]
    %v753 = vld [vmem:[#allocation8 + $0x2bc] sm:$0xff]
    %v754 = vld [vmem:[#allocation8 + $0x2c4] sm:$0xff]
    %v755 = vld [vmem:[#allocation8 + $0x2cc] sm:$0xff]
    %v756 = vld [vmem:[#allocation8 + $0x2d4] sm:$0xf]
    %v757 = vld [vmem:[#allocation8 + $0x2d8] sm:$0xff]
    %v758 = vld [vmem:[#allocation8 + $0x2e0] sm:$0xff]
    %v759 = vld [vmem:[#allocation8 + $0x2e8] sm:$0xff]
    %v760 = vld [vmem:[#allocation8 + $0x2f0] sm:$0xf]
    %v761 = vld [vmem:[#allocation8 + $0x2f4] sm:$0xff]
    %v762 = vld [vmem:[#allocation8 + $0x2fc] sm:$0xff]
    %v763 = vld [vmem:[#allocation8 + $0x304] sm:$0xff]
    %v764 = vld [vmem:[#allocation8 + $0x30c] sm:$0xf]
    %v765 = vld [vmem:[#allocation8 + $0x310] sm:$0xff]
    %v766 = vld [vmem:[#allocation8 + $0x318] sm:$0xff]
    %v767 = vld [vmem:[#allocation8 + $0x320] sm:$0xff]
    %v768 = vld [vmem:[#allocation8 + $0x328] sm:$0xf]
    %v769 = vld [vmem:[#allocation8 + $0x32c] sm:$0xff]
    %v770 = vld [vmem:[#allocation8 + $0x334] sm:$0xff]
    %v771 = vld [vmem:[#allocation8 + $0x33c] sm:$0xff]
    %v772 = vld [vmem:[#allocation8 + $0x344] sm:$0xf]
    %v773 = vld [vmem:[#allocation8 + $0x348] sm:$0xff]
    %v774 = vld [vmem:[#allocation8 + $0x350] sm:$0xff]
    %v775 = vld [vmem:[#allocation8 + $0x358] sm:$0xff]
    %v776 = vld [vmem:[#allocation8 + $0x360] sm:$0xf]
    %v777 = vld [vmem:[#allocation8 + $0x364] sm:$0xff]
    %v778 = vld [vmem:[#allocation8 + $0x36c] sm:$0xff]
    %v779 = vld [vmem:[#allocation8 + $0x374] sm:$0xff]
    %v780 = vld [vmem:[#allocation8 + $0x37c] sm:$0xf]
    %v781 = vld [vmem:[%s6] sm:$0xff]
    %v783 = vlaneseq
    %v784 = vshrl.u32 %v783, 7
    %v785 = vsub.s32 0, %v784
    %v786 = vrot.slane %v781, %v785
    %v787 = vlaneseq
    %v788 = vshrl.u32 %v787, 7
    %v789 = vsub.s32 1, %v788
    %v790 = vrot.slane %v781, %v789
    %v791 = vlaneseq
    %v792 = vshrl.u32 %v791, 7
    %v793 = vsub.s32 2, %v792
    %v794 = vrot.slane %v781, %v793
    %v795 = vlaneseq
    %v796 = vshrl.u32 %v795, 7
    %v797 = vsub.s32 3, %v796
    %v798 = vrot.slane %v781, %v797
    %v799 = vlaneseq
    %v800 = vshrl.u32 %v799, 7
    %v801 = vsub.s32 4, %v800
    %v802 = vrot.slane %v781, %v801
    %v803 = vlaneseq
    %v804 = vshrl.u32 %v803, 7
    %v805 = vsub.s32 5, %v804
    %v806 = vrot.slane %v781, %v805
    %v807 = vlaneseq
    %v808 = vshrl.u32 %v807, 7
    %v809 = vsub.s32 6, %v808
    %v810 = vrot.slane %v781, %v809
    %v946 = vunpack.c.l.b16 %v653
    %v947 = vunpack.c.h.b16 %v653
    %v948 = vunpack.c.l.b16 %v654
    %v949 = vunpack.c.h.b16 %v654
    %v950 = vunpack.c.l.b16 %v655
    %v951 = vunpack.c.h.b16 %v655
    %v952 = vunpack.c.l.b16 %v656
    %v953 = vunpack.c.l.b16 %v657
    %v954 = vunpack.c.h.b16 %v657
    %v955 = vunpack.c.l.b16 %v658
    %v956 = vunpack.c.h.b16 %v658
    %v957 = vunpack.c.l.b16 %v659
    %v958 = vunpack.c.h.b16 %v659
    %v959 = vunpack.c.l.b16 %v660
    %v960 = vunpack.c.l.b16 %v661
    %v961 = vunpack.c.h.b16 %v661
    %v962 = vunpack.c.l.b16 %v662
    %v963 = vunpack.c.h.b16 %v662
    %v964 = vunpack.c.l.b16 %v663
    %v965 = vunpack.c.h.b16 %v663
    %v966 = vunpack.c.l.b16 %v664
    %v967 = vunpack.c.l.b16 %v665
    %v968 = vunpack.c.h.b16 %v665
    %v969 = vunpack.c.l.b16 %v666
    %v970 = vunpack.c.h.b16 %v666
    %v971 = vunpack.c.l.b16 %v667
    %v972 = vunpack.c.h.b16 %v667
    %v973 = vunpack.c.l.b16 %v668
    %v974 = vunpack.c.l.b16 %v669
    %v975 = vunpack.c.h.b16 %v669
    %v976 = vunpack.c.l.b16 %v670
    %v977 = vunpack.c.h.b16 %v670
    %v978 = vunpack.c.l.b16 %v671
    %v979 = vunpack.c.h.b16 %v671
    %v980 = vunpack.c.l.b16 %v672
    %v981 = vunpack.c.l.b16 %v673
    %v982 = vunpack.c.h.b16 %v673
    %v983 = vunpack.c.l.b16 %v674
    %v984 = vunpack.c.h.b16 %v674
    %v985 = vunpack.c.l.b16 %v675
    %v986 = vunpack.c.h.b16 %v675
    %v987 = vunpack.c.l.b16 %v676
    %v988 = vunpack.c.l.b16 %v677
    %v989 = vunpack.c.h.b16 %v677
    %v990 = vunpack.c.l.b16 %v678
    %v991 = vunpack.c.h.b16 %v678
    %v992 = vunpack.c.l.b16 %v679
    %v993 = vunpack.c.h.b16 %v679
    %v994 = vunpack.c.l.b16 %v680
    %v995 = vunpack.c.l.b16 %v681
    %v996 = vunpack.c.h.b16 %v681
    %v997 = vunpack.c.l.b16 %v682
    %v998 = vunpack.c.h.b16 %v682
    %v999 = vunpack.c.l.b16 %v683
    %v1000 = vunpack.c.h.b16 %v683
    %v1001 = vunpack.c.l.b16 %v684
    %v1002 = vunpack.c.l.b16 %v685
    %v1003 = vunpack.c.h.b16 %v685
    %v1004 = vunpack.c.l.b16 %v686
    %v1005 = vunpack.c.h.b16 %v686
    %v1006 = vunpack.c.l.b16 %v687
    %v1007 = vunpack.c.h.b16 %v687
    %v1008 = vunpack.c.l.b16 %v688
    %v1009 = vunpack.c.l.b16 %v689
    %v1010 = vunpack.c.h.b16 %v689
    %v1011 = vunpack.c.l.b16 %v690
    %v1012 = vunpack.c.h.b16 %v690
    %v1013 = vunpack.c.l.b16 %v691
    %v1014 = vunpack.c.h.b16 %v691
    %v1015 = vunpack.c.l.b16 %v692
    %v1016 = vunpack.c.l.b16 %v693
    %v1017 = vunpack.c.h.b16 %v693
    %v1018 = vunpack.c.l.b16 %v694
    %v1019 = vunpack.c.h.b16 %v694
    %v1020 = vunpack.c.l.b16 %v695
    %v1021 = vunpack.c.h.b16 %v695
    %v1022 = vunpack.c.l.b16 %v696
    %v1023 = vunpack.c.l.b16 %v697
    %v1024 = vunpack.c.h.b16 %v697
    %v1025 = vunpack.c.l.b16 %v698
    %v1026 = vunpack.c.h.b16 %v698
    %v1027 = vunpack.c.l.b16 %v699
    %v1028 = vunpack.c.h.b16 %v699
    %v1029 = vunpack.c.l.b16 %v700
    %v1030 = vunpack.c.l.b16 %v701
    %v1031 = vunpack.c.h.b16 %v701
    %v1032 = vunpack.c.l.b16 %v702
    %v1033 = vunpack.c.h.b16 %v702
    %v1034 = vunpack.c.l.b16 %v703
    %v1035 = vunpack.c.h.b16 %v703
    %v1036 = vunpack.c.l.b16 %v704
    %v1037 = vunpack.c.l.b16 %v705
    %v1038 = vunpack.c.h.b16 %v705
    %v1039 = vunpack.c.l.b16 %v706
    %v1040 = vunpack.c.h.b16 %v706
    %v1041 = vunpack.c.l.b16 %v707
    %v1042 = vunpack.c.h.b16 %v707
    %v1043 = vunpack.c.l.b16 %v708
    %v1044 = vunpack.c.l.b16 %v709
    %v1045 = vunpack.c.h.b16 %v709
    %v1046 = vunpack.c.l.b16 %v710
    %v1047 = vunpack.c.h.b16 %v710
    %v1048 = vunpack.c.l.b16 %v711
    %v1049 = vunpack.c.h.b16 %v711
    %v1050 = vunpack.c.l.b16 %v712
    %v1051 = vunpack.c.l.b16 %v713
    %v1052 = vunpack.c.h.b16 %v713
    %v1053 = vunpack.c.l.b16 %v714
    %v1054 = vunpack.c.h.b16 %v714
    %v1055 = vunpack.c.l.b16 %v715
    %v1056 = vunpack.c.h.b16 %v715
    %v1057 = vunpack.c.l.b16 %v716
    %v1058 = vunpack.c.l.b16 %v717
    %v1059 = vunpack.c.h.b16 %v717
    %v1060 = vunpack.c.l.b16 %v718
    %v1061 = vunpack.c.h.b16 %v718
    %v1062 = vunpack.c.l.b16 %v719
    %v1063 = vunpack.c.h.b16 %v719
    %v1064 = vunpack.c.l.b16 %v720
    %v1065 = vunpack.c.l.b16 %v721
    %v1066 = vunpack.c.h.b16 %v721
    %v1067 = vunpack.c.l.b16 %v722
    %v1068 = vunpack.c.h.b16 %v722
    %v1069 = vunpack.c.l.b16 %v723
    %v1070 = vunpack.c.h.b16 %v723
    %v1071 = vunpack.c.l.b16 %v724
    %v1072 = vunpack.c.l.b16 %v725
    %v1073 = vunpack.c.h.b16 %v725
    %v1074 = vunpack.c.l.b16 %v726
    %v1075 = vunpack.c.h.b16 %v726
    %v1076 = vunpack.c.l.b16 %v727
    %v1077 = vunpack.c.h.b16 %v727
    %v1078 = vunpack.c.l.b16 %v728
    %v1079 = vunpack.c.l.b16 %v729
    %v1080 = vunpack.c.h.b16 %v729
    %v1081 = vunpack.c.l.b16 %v730
    %v1082 = vunpack.c.h.b16 %v730
    %v1083 = vunpack.c.l.b16 %v731
    %v1084 = vunpack.c.h.b16 %v731
    %v1085 = vunpack.c.l.b16 %v732
    %v1086 = vunpack.c.l.b16 %v733
    %v1087 = vunpack.c.h.b16 %v733
    %v1088 = vunpack.c.l.b16 %v734
    %v1089 = vunpack.c.h.b16 %v734
    %v1090 = vunpack.c.l.b16 %v735
    %v1091 = vunpack.c.h.b16 %v735
    %v1092 = vunpack.c.l.b16 %v736
    %v1093 = vunpack.c.l.b16 %v737
    %v1094 = vunpack.c.h.b16 %v737
    %v1095 = vunpack.c.l.b16 %v738
    %v1096 = vunpack.c.h.b16 %v738
    %v1097 = vunpack.c.l.b16 %v739
    %v1098 = vunpack.c.h.b16 %v739
    %v1099 = vunpack.c.l.b16 %v740
    %v1100 = vunpack.c.l.b16 %v741
    %v1101 = vunpack.c.h.b16 %v741
    %v1102 = vunpack.c.l.b16 %v742
    %v1103 = vunpack.c.h.b16 %v742
    %v1104 = vunpack.c.l.b16 %v743
    %v1105 = vunpack.c.h.b16 %v743
    %v1106 = vunpack.c.l.b16 %v744
    %v1107 = vunpack.c.l.b16 %v745
    %v1108 = vunpack.c.h.b16 %v745
    %v1109 = vunpack.c.l.b16 %v746
    %v1110 = vunpack.c.h.b16 %v746
    %v1111 = vunpack.c.l.b16 %v747
    %v1112 = vunpack.c.h.b16 %v747
    %v1113 = vunpack.c.l.b16 %v748
    %v1114 = vunpack.c.l.b16 %v749
    %v1115 = vunpack.c.h.b16 %v749
    %v1116 = vunpack.c.l.b16 %v750
    %v1117 = vunpack.c.h.b16 %v750
    %v1118 = vunpack.c.l.b16 %v751
    %v1119 = vunpack.c.h.b16 %v751
    %v1120 = vunpack.c.l.b16 %v752
    %v1121 = vunpack.c.l.b16 %v753
    %v1122 = vunpack.c.h.b16 %v753
    %v1123 = vunpack.c.l.b16 %v754
    %v1124 = vunpack.c.h.b16 %v754
    %v1125 = vunpack.c.l.b16 %v755
    %v1126 = vunpack.c.h.b16 %v755
    %v1127 = vunpack.c.l.b16 %v756
    %v1128 = vunpack.c.l.b16 %v757
    %v1129 = vunpack.c.h.b16 %v757
    %v1130 = vunpack.c.l.b16 %v758
    %v1131 = vunpack.c.h.b16 %v758
    %v1132 = vunpack.c.l.b16 %v759
    %v1133 = vunpack.c.h.b16 %v759
    %v1134 = vunpack.c.l.b16 %v760
    %v1135 = vunpack.c.l.b16 %v761
    %v1136 = vunpack.c.h.b16 %v761
    %v1137 = vunpack.c.l.b16 %v762
    %v1138 = vunpack.c.h.b16 %v762
    %v1139 = vunpack.c.l.b16 %v763
    %v1140 = vunpack.c.h.b16 %v763
    %v1141 = vunpack.c.l.b16 %v764
    %v1142 = vunpack.c.l.b16 %v765
    %v1143 = vunpack.c.h.b16 %v765
    %v1144 = vunpack.c.l.b16 %v766
    %v1145 = vunpack.c.h.b16 %v766
    %v1146 = vunpack.c.l.b16 %v767
    %v1147 = vunpack.c.h.b16 %v767
    %v1148 = vunpack.c.l.b16 %v768
    %v1149 = vunpack.c.l.b16 %v769
    %v1150 = vunpack.c.h.b16 %v769
    %v1151 = vunpack.c.l.b16 %v770
    %v1152 = vunpack.c.h.b16 %v770
    %v1153 = vunpack.c.l.b16 %v771
    %v1154 = vunpack.c.h.b16 %v771
    %v1155 = vunpack.c.l.b16 %v772
    %v1156 = vunpack.c.l.b16 %v773
    %v1157 = vunpack.c.h.b16 %v773
    %v1158 = vunpack.c.l.b16 %v774
    %v1159 = vunpack.c.h.b16 %v774
    %v1160 = vunpack.c.l.b16 %v775
    %v1161 = vunpack.c.h.b16 %v775
    %v1162 = vunpack.c.l.b16 %v776
    %v1163 = vunpack.c.l.b16 %v777
    %v1164 = vunpack.c.h.b16 %v777
    %v1165 = vunpack.c.l.b16 %v778
    %v1166 = vunpack.c.h.b16 %v778
    %v1167 = vunpack.c.l.b16 %v779
    %v1168 = vunpack.c.h.b16 %v779
    %v1169 = vunpack.c.l.b16 %v780
    %v1170 = vpack.c.b16 %v953, %v946
    %v1171 = vpack.c.b16 %v954, %v947
    %v1172 = vpack.c.b16 %v955, %v948
    %v1173 = vpack.c.b16 %v956, %v949
    %v1174 = vpack.c.b16 %v957, %v950
    %v1175 = vpack.c.b16 %v958, %v951
    %v1176 = vpack.c.b16 %v959, %v952
    %v1177 = vpack.c.b16 %v967, %v960
    %v1178 = vpack.c.b16 %v968, %v961
    %v1179 = vpack.c.b16 %v969, %v962
    %v1180 = vpack.c.b16 %v970, %v963
    %v1181 = vpack.c.b16 %v971, %v964
    %v1182 = vpack.c.b16 %v972, %v965
    %v1183 = vpack.c.b16 %v973, %v966
    %v1184 = vpack.c.b16 %v981, %v974
    %v1185 = vpack.c.b16 %v982, %v975
    %v1186 = vpack.c.b16 %v983, %v976
    %v1187 = vpack.c.b16 %v984, %v977
    %v1188 = vpack.c.b16 %v985, %v978
    %v1189 = vpack.c.b16 %v986, %v979
    %v1190 = vpack.c.b16 %v987, %v980
    %v1191 = vpack.c.b16 %v995, %v988
    %v1192 = vpack.c.b16 %v996, %v989
    %v1193 = vpack.c.b16 %v997, %v990
    %v1194 = vpack.c.b16 %v998, %v991
    %v1195 = vpack.c.b16 %v999, %v992
    %v1196 = vpack.c.b16 %v1000, %v993
    %v1197 = vpack.c.b16 %v1001, %v994
    %v1198 = vpack.c.b16 %v1009, %v1002
    %v1199 = vpack.c.b16 %v1010, %v1003
    %v1200 = vpack.c.b16 %v1011, %v1004
    %v1201 = vpack.c.b16 %v1012, %v1005
    %v1202 = vpack.c.b16 %v1013, %v1006
    %v1203 = vpack.c.b16 %v1014, %v1007
    %v1204 = vpack.c.b16 %v1015, %v1008
    %v1205 = vpack.c.b16 %v1023, %v1016
    %v1206 = vpack.c.b16 %v1024, %v1017
    %v1207 = vpack.c.b16 %v1025, %v1018
    %v1208 = vpack.c.b16 %v1026, %v1019
    %v1209 = vpack.c.b16 %v1027, %v1020
    %v1210 = vpack.c.b16 %v1028, %v1021
    %v1211 = vpack.c.b16 %v1029, %v1022
    %v1212 = vpack.c.b16 %v1037, %v1030
    %v1213 = vpack.c.b16 %v1038, %v1031
    %v1214 = vpack.c.b16 %v1039, %v1032
    %v1215 = vpack.c.b16 %v1040, %v1033
    %v1216 = vpack.c.b16 %v1041, %v1034
    %v1217 = vpack.c.b16 %v1042, %v1035
    %v1218 = vpack.c.b16 %v1043, %v1036
    %v1219 = vpack.c.b16 %v1051, %v1044
    %v1220 = vpack.c.b16 %v1052, %v1045
    %v1221 = vpack.c.b16 %v1053, %v1046
    %v1222 = vpack.c.b16 %v1054, %v1047
    %v1223 = vpack.c.b16 %v1055, %v1048
    %v1224 = vpack.c.b16 %v1056, %v1049
    %v1225 = vpack.c.b16 %v1057, %v1050
    %v1226 = vpack.c.b16 %v1065, %v1058
    %v1227 = vpack.c.b16 %v1066, %v1059
    %v1228 = vpack.c.b16 %v1067, %v1060
    %v1229 = vpack.c.b16 %v1068, %v1061
    %v1230 = vpack.c.b16 %v1069, %v1062
    %v1231 = vpack.c.b16 %v1070, %v1063
    %v1232 = vpack.c.b16 %v1071, %v1064
    %v1233 = vpack.c.b16 %v1079, %v1072
    %v1234 = vpack.c.b16 %v1080, %v1073
    %v1235 = vpack.c.b16 %v1081, %v1074
    %v1236 = vpack.c.b16 %v1082, %v1075
    %v1237 = vpack.c.b16 %v1083, %v1076
    %v1238 = vpack.c.b16 %v1084, %v1077
    %v1239 = vpack.c.b16 %v1085, %v1078
    %v1240 = vpack.c.b16 %v1093, %v1086
    %v1241 = vpack.c.b16 %v1094, %v1087
    %v1242 = vpack.c.b16 %v1095, %v1088
    %v1243 = vpack.c.b16 %v1096, %v1089
    %v1244 = vpack.c.b16 %v1097, %v1090
    %v1245 = vpack.c.b16 %v1098, %v1091
    %v1246 = vpack.c.b16 %v1099, %v1092
    %v1247 = vpack.c.b16 %v1107, %v1100
    %v1248 = vpack.c.b16 %v1108, %v1101
    %v1249 = vpack.c.b16 %v1109, %v1102
    %v1250 = vpack.c.b16 %v1110, %v1103
    %v1251 = vpack.c.b16 %v1111, %v1104
    %v1252 = vpack.c.b16 %v1112, %v1105
    %v1253 = vpack.c.b16 %v1113, %v1106
    %v1254 = vpack.c.b16 %v1121, %v1114
    %v1255 = vpack.c.b16 %v1122, %v1115
    %v1256 = vpack.c.b16 %v1123, %v1116
    %v1257 = vpack.c.b16 %v1124, %v1117
    %v1258 = vpack.c.b16 %v1125, %v1118
    %v1259 = vpack.c.b16 %v1126, %v1119
    %v1260 = vpack.c.b16 %v1127, %v1120
    %v1261 = vpack.c.b16 %v1135, %v1128
    %v1262 = vpack.c.b16 %v1136, %v1129
    %v1263 = vpack.c.b16 %v1137, %v1130
    %v1264 = vpack.c.b16 %v1138, %v1131
    %v1265 = vpack.c.b16 %v1139, %v1132
    %v1266 = vpack.c.b16 %v1140, %v1133
    %v1267 = vpack.c.b16 %v1141, %v1134
    %v1268 = vpack.c.b16 %v1149, %v1142
    %v1269 = vpack.c.b16 %v1150, %v1143
    %v1270 = vpack.c.b16 %v1151, %v1144
    %v1271 = vpack.c.b16 %v1152, %v1145
    %v1272 = vpack.c.b16 %v1153, %v1146
    %v1273 = vpack.c.b16 %v1154, %v1147
    %v1274 = vpack.c.b16 %v1155, %v1148
    %v1275 = vpack.c.b16 %v1163, %v1156
    %v1276 = vpack.c.b16 %v1164, %v1157
    %v1277 = vpack.c.b16 %v1165, %v1158
    %v1278 = vpack.c.b16 %v1166, %v1159
    %v1279 = vpack.c.b16 %v1167, %v1160
    %v1280 = vpack.c.b16 %v1168, %v1161
    %v1281 = vpack.c.b16 %v1169, %v1162
    %1394 = vmatprep.subr.bf16.mxu0 %v1171
    %1395 = vmatpush1.bf16.msra.mxu0 %v1170
    %1396 = vmatprep.subr.bf16.mxu0 %v1178
    %1397 = vmatpush1.bf16.msra.mxu0 %v1177
    %1398 = vmatprep.subr.bf16.mxu0 %v1185
    %1399 = vmatpush1.bf16.msra.mxu0 %v1184
    %1400 = vmatprep.subr.bf16.mxu0 %v1192
    %1401 = vmatpush1.bf16.msra.mxu0 %v1191
    %1402 = vmatprep.subr.bf16.mxu0 %v1199
    %1403 = vmatpush1.bf16.msra.mxu0 %v1198
    %1404 = vmatprep.subr.bf16.mxu0 %v1206
    %1405 = vmatpush1.bf16.msra.mxu0 %v1205
    %1406 = vmatprep.subr.bf16.mxu0 %v1213
    %1407 = vmatpush1.bf16.msra.mxu0 %v1212
    %1408 = vmatprep.subr.bf16.mxu0 %v1220
    %1409 = vmatpush1.bf16.msra.mxu0 %v1219
    %1410 = vmatprep.subr.bf16.mxu0 %v1227
    %1411 = vmatpush1.bf16.msra.mxu0 %v1226
    %1412 = vmatprep.subr.bf16.mxu0 %v1234
    %1413 = vmatpush1.bf16.msra.mxu0 %v1233
    %1414 = vmatprep.subr.bf16.mxu0 %v1241
    %1415 = vmatpush1.bf16.msra.mxu0 %v1240
    %1416 = vmatprep.subr.bf16.mxu0 %v1248
    %1417 = vmatpush1.bf16.msra.mxu0 %v1247
    %1418 = vmatprep.subr.bf16.mxu0 %v1255
    %1419 = vmatpush1.bf16.msra.mxu0 %v1254
    %1420 = vmatprep.subr.bf16.mxu0 %v1262
    %1421 = vmatpush1.bf16.msra.mxu0 %v1261
    %1422 = vmatprep.subr.bf16.mxu0 %v1269
    %1423 = vmatpush1.bf16.msra.mxu0 %v1268
    %1424 = vmatprep.subr.bf16.mxu0 %v1276
    %1425 = vmatpush1.bf16.msra.mxu0 %v1275
    %1426 = vmatprep.mubr.bf16.mxu0 %v646
    %1427 = vmatmul.mubr.bf16.gmra.mrb[0].mxu0 %v645
    %v1428 = vpop.f32.mrb[0].mxu0
    %v1429 = vadd.f32 %v786, %v1428
    %v1430 = vpop.f32.mrb[0].mxu0
    %v1431 = vadd.f32 %v790, %v1430
    %v1432 = vpop.f32.mrb[0].mxu0
    %v1433 = vadd.f32 %v786, %v1432
    %v1434 = vpop.f32.mrb[0].mxu0
    %v1435 = vadd.f32 %v790, %v1434
    %1436 = vmatprep.mubr.bf16.mxu0 %v648
    %1437 = vmatmul.mubr.bf16.gmra.mrb[0].mxu0 %v647
    %v1438 = vpop.f32.mrb[0].mxu0
    %v1439 = vadd.f32 %v786, %v1438
    %v1440 = vpop.f32.mrb[0].mxu0
    %v1441 = vadd.f32 %v790, %v1440
    %v1442 = vpop.f32.mrb[0].mxu0
    %v1443 = vadd.f32 %v786, %v1442
    %v1444 = vpop.f32.mrb[0].mxu0
    %v1445 = vadd.f32 %v790, %v1444
    %1446 = vmatprep.mubr.bf16.mxu0 %v650
    %1447 = vmatmul.mubr.bf16.gmra.mrb[0].mxu0 %v649
    %v1448 = vpop.f32.mrb[0].mxu0
    %v1449 = vadd.f32 %v786, %v1448
    %v1450 = vpop.f32.mrb[0].mxu0
    %v1451 = vadd.f32 %v790, %v1450
    %v1452 = vpop.f32.mrb[0].mxu0
    %v1453 = vadd.f32 %v786, %v1452
    %v1454 = vpop.f32.mrb[0].mxu0
    %v1455 = vadd.f32 %v790, %v1454
    %1456 = vmatprep.mubr.bf16.mxu0 %v652
    %1457 = vmatmul.mubr.bf16.gmra.mrb[0].mxu0 %v651
    %v1458 = vpop.f32.mrb[0].mxu0
    %v1459 = vadd.f32 %v786, %v1458
    %v1460 = vpop.f32.mrb[0].mxu0
    %v1461 = vadd.f32 %v790, %v1460
    %v1462 = vpop.f32.mrb[0].mxu0
    %v1463 = vadd.f32 %v786, %v1462
    %v1464 = vpop.f32.mrb[0].mxu0
    %v1465 = vadd.f32 %v790, %v1464
    %1466 = vdwg.mxu0
    %1467 = vmatprep.subr.bf16.mxu0 %v1173
    %1468 = vmatpush1.bf16.msra.mxu0 %v1172
    %1469 = vmatprep.subr.bf16.mxu0 %v1180
    %1470 = vmatpush1.bf16.msra.mxu0 %v1179
    %1471 = vmatprep.subr.bf16.mxu0 %v1187
    %1472 = vmatpush1.bf16.msra.mxu0 %v1186
    %1473 = vmatprep.subr.bf16.mxu0 %v1194
    %1474 = vmatpush1.bf16.msra.mxu0 %v1193
    %1475 = vmatprep.subr.bf16.mxu0 %v1201
    %1476 = vmatpush1.bf16.msra.mxu0 %v1200
    %1477 = vmatprep.subr.bf16.mxu0 %v1208
    %1478 = vmatpush1.bf16.msra.mxu0 %v1207
    %1479 = vmatprep.subr.bf16.mxu0 %v1215
    %1480 = vmatpush1.bf16.msra.mxu0 %v1214
    %1481 = vmatprep.subr.bf16.mxu0 %v1222
    %1482 = vmatpush1.bf16.msra.mxu0 %v1221
    %1483 = vmatprep.subr.bf16.mxu0 %v1229
    %1484 = vmatpush1.bf16.msra.mxu0 %v1228
    %1485 = vmatprep.subr.bf16.mxu0 %v1236
    %1486 = vmatpush1.bf16.msra.mxu0 %v1235
    %1487 = vmatprep.subr.bf16.mxu0 %v1243
    %1488 = vmatpush1.bf16.msra.mxu0 %v1242
    %1489 = vmatprep.subr.bf16.mxu0 %v1250
    %1490 = vmatpush1.bf16.msra.mxu0 %v1249
    %1491 = vmatprep.subr.bf16.mxu0 %v1257
    %1492 = vmatpush1.bf16.msra.mxu0 %v1256
    %1493 = vmatprep.subr.bf16.mxu0 %v1264
    %1494 = vmatpush1.bf16.msra.mxu0 %v1263
    %1495 = vmatprep.subr.bf16.mxu0 %v1271
    %1496 = vmatpush1.bf16.msra.mxu0 %v1270
    %1497 = vmatprep.subr.bf16.mxu0 %v1278
    %1498 = vmatpush1.bf16.msra.mxu0 %v1277
    %1499 = vmatprep.mubr.bf16.mxu0 %v646
    %1500 = vmatmul.mubr.bf16.gmra.mrb[0].mxu0 %v645
    %v1501 = vpop.f32.mrb[0].mxu0
    %v1502 = vadd.f32 %v794, %v1501
    %v1503 = vpop.f32.mrb[0].mxu0
    %v1504 = vadd.f32 %v798, %v1503
    %v1505 = vpop.f32.mrb[0].mxu0
    %v1506 = vadd.f32 %v794, %v1505
    %v1507 = vpop.f32.mrb[0].mxu0
    %v1508 = vadd.f32 %v798, %v1507
    %1509 = vmatprep.mubr.bf16.mxu0 %v648
    %1510 = vmatmul.mubr.bf16.gmra.mrb[0].mxu0 %v647
    %v1511 = vpop.f32.mrb[0].mxu0
    %v1512 = vadd.f32 %v794, %v1511
    %v1513 = vpop.f32.mrb[0].mxu0
    %v1514 = vadd.f32 %v798, %v1513
    %v1515 = vpop.f32.mrb[0].mxu0
    %v1516 = vadd.f32 %v794, %v1515
    %v1517 = vpop.f32.mrb[0].mxu0
    %v1518 = vadd.f32 %v798, %v1517
    %1519 = vmatprep.mubr.bf16.mxu0 %v650
    %1520 = vmatmul.mubr.bf16.gmra.mrb[0].mxu0 %v649
    %v1521 = vpop.f32.mrb[0].mxu0
    %v1522 = vadd.f32 %v794, %v1521
    %v1523 = vpop.f32.mrb[0].mxu0
    %v1524 = vadd.f32 %v798, %v1523
    %v1525 = vpop.f32.mrb[0].mxu0
    %v1526 = vadd.f32 %v794, %v1525
    %v1527 = vpop.f32.mrb[0].mxu0
    %v1528 = vadd.f32 %v798, %v1527
    %1529 = vmatprep.mubr.bf16.mxu0 %v652
    %1530 = vmatmul.mubr.bf16.gmra.mrb[0].mxu0 %v651
    %v1531 = vpop.f32.mrb[0].mxu0
    %v1532 = vadd.f32 %v794, %v1531
    %v1533 = vpop.f32.mrb[0].mxu0
    %v1534 = vadd.f32 %v798, %v1533
    %v1535 = vpop.f32.mrb[0].mxu0
    %v1536 = vadd.f32 %v794, %v1535
    %v1537 = vpop.f32.mrb[0].mxu0
    %v1538 = vadd.f32 %v798, %v1537
    %1539 = vdwg.mxu0
    %1540 = vmatprep.subr.bf16.mxu0 %v1175
    %1541 = vmatpush1.bf16.msra.mxu0 %v1174
    %1542 = vmatprep.subr.bf16.mxu0 %v1182
    %1543 = vmatpush1.bf16.msra.mxu0 %v1181
    %1544 = vmatprep.subr.bf16.mxu0 %v1189
    %1545 = vmatpush1.bf16.msra.mxu0 %v1188
    %1546 = vmatprep.subr.bf16.mxu0 %v1196
    %1547 = vmatpush1.bf16.msra.mxu0 %v1195
    %1548 = vmatprep.subr.bf16.mxu0 %v1203
    %1549 = vmatpush1.bf16.msra.mxu0 %v1202
    %1550 = vmatprep.subr.bf16.mxu0 %v1210
    %1551 = vmatpush1.bf16.msra.mxu0 %v1209
    %1552 = vmatprep.subr.bf16.mxu0 %v1217
    %1553 = vmatpush1.bf16.msra.mxu0 %v1216
    %1554 = vmatprep.subr.bf16.mxu0 %v1224
    %1555 = vmatpush1.bf16.msra.mxu0 %v1223
    %1556 = vmatprep.subr.bf16.mxu0 %v1231
    %1557 = vmatpush1.bf16.msra.mxu0 %v1230
    %1558 = vmatprep.subr.bf16.mxu0 %v1238
    %1559 = vmatpush1.bf16.msra.mxu0 %v1237
    %1560 = vmatprep.subr.bf16.mxu0 %v1245
    %1561 = vmatpush1.bf16.msra.mxu0 %v1244
    %1562 = vmatprep.subr.bf16.mxu0 %v1252
    %1563 = vmatpush1.bf16.msra.mxu0 %v1251
    %1564 = vmatprep.subr.bf16.mxu0 %v1259
    %1565 = vmatpush1.bf16.msra.mxu0 %v1258
    %1566 = vmatprep.subr.bf16.mxu0 %v1266
    %1567 = vmatpush1.bf16.msra.mxu0 %v1265
    %1568 = vmatprep.subr.bf16.mxu0 %v1273
    %1569 = vmatpush1.bf16.msra.mxu0 %v1272
    %1570 = vmatprep.subr.bf16.mxu0 %v1280
    %1571 = vmatpush1.bf16.msra.mxu0 %v1279
    %1572 = vmatprep.mubr.bf16.mxu0 %v646
    %1573 = vmatmul.mubr.bf16.gmra.mrb[0].mxu0 %v645
    %v1574 = vpop.f32.mrb[0].mxu0
    %v1575 = vadd.f32 %v802, %v1574
    %v1576 = vpop.f32.mrb[0].mxu0
    %v1577 = vadd.f32 %v806, %v1576
    %v1578 = vpop.f32.mrb[0].mxu0
    %v1579 = vadd.f32 %v802, %v1578
    %v1580 = vpop.f32.mrb[0].mxu0
    %v1581 = vadd.f32 %v806, %v1580
    %1582 = vmatprep.mubr.bf16.mxu0 %v648
    %1583 = vmatmul.mubr.bf16.gmra.mrb[0].mxu0 %v647
    %v1584 = vpop.f32.mrb[0].mxu0
    %v1585 = vadd.f32 %v802, %v1584
    %v1586 = vpop.f32.mrb[0].mxu0
    %v1587 = vadd.f32 %v806, %v1586
    %v1588 = vpop.f32.mrb[0].mxu0
    %v1589 = vadd.f32 %v802, %v1588
    %v1590 = vpop.f32.mrb[0].mxu0
    %v1591 = vadd.f32 %v806, %v1590
    %1592 = vmatprep.mubr.bf16.mxu0 %v650
    %1593 = vmatmul.mubr.bf16.gmra.mrb[0].mxu0 %v649
    %v1594 = vpop.f32.mrb[0].mxu0
    %v1595 = vadd.f32 %v802, %v1594
    %v1596 = vpop.f32.mrb[0].mxu0
    %v1597 = vadd.f32 %v806, %v1596
    %v1598 = vpop.f32.mrb[0].mxu0
    %v1599 = vadd.f32 %v802, %v1598
    %v1600 = vpop.f32.mrb[0].mxu0
    %v1601 = vadd.f32 %v806, %v1600
    %1602 = vmatprep.mubr.bf16.mxu0 %v652
    %1603 = vmatmul.mubr.bf16.gmra.mrb[0].mxu0 %v651
    %v1604 = vpop.f32.mrb[0].mxu0
    %v1605 = vadd.f32 %v802, %v1604
    %v1606 = vpop.f32.mrb[0].mxu0
    %v1607 = vadd.f32 %v806, %v1606
    %v1608 = vpop.f32.mrb[0].mxu0
    %v1609 = vadd.f32 %v802, %v1608
    %v1610 = vpop.f32.mrb[0].mxu0
    %v1611 = vadd.f32 %v806, %v1610
    %1612 = vdwg.mxu0
    %1613 = vmatprep.subr.bf16.mxu0 0
    %1614 = vmatpush1.bf16.msra.mxu0 %v1176
    %1615 = vmatprep.subr.bf16.mxu0 0
    %1616 = vmatpush1.bf16.msra.mxu0 %v1183
    %1617 = vmatprep.subr.bf16.mxu0 0
    %1618 = vmatpush1.bf16.msra.mxu0 %v1190
    %1619 = vmatprep.subr.bf16.mxu0 0
    %1620 = vmatpush1.bf16.msra.mxu0 %v1197
    %1621 = vmatprep.subr.bf16.mxu0 0
    %1622 = vmatpush1.bf16.msra.mxu0 %v1204
    %1623 = vmatprep.subr.bf16.mxu0 0
    %1624 = vmatpush1.bf16.msra.mxu0 %v1211
    %1625 = vmatprep.subr.bf16.mxu0 0
    %1626 = vmatpush1.bf16.msra.mxu0 %v1218
    %1627 = vmatprep.subr.bf16.mxu0 0
    %1628 = vmatpush1.bf16.msra.mxu0 %v1225
    %1629 = vmatprep.subr.bf16.mxu0 0
    %1630 = vmatpush1.bf16.msra.mxu0 %v1232
    %1631 = vmatprep.subr.bf16.mxu0 0
    %1632 = vmatpush1.bf16.msra.mxu0 %v1239
    %1633 = vmatprep.subr.bf16.mxu0 0
    %1634 = vmatpush1.bf16.msra.mxu0 %v1246
    %1635 = vmatprep.subr.bf16.mxu0 0
    %1636 = vmatpush1.bf16.msra.mxu0 %v1253
    %1637 = vmatprep.subr.bf16.mxu0 0
    %1638 = vmatpush1.bf16.msra.mxu0 %v1260
    %1639 = vmatprep.subr.bf16.mxu0 0
    %1640 = vmatpush1.bf16.msra.mxu0 %v1267
    %1641 = vmatprep.subr.bf16.mxu0 0
    %1642 = vmatpush1.bf16.msra.mxu0 %v1274
    %1643 = vmatprep.subr.bf16.mxu0 0
    %1644 = vmatpush1.bf16.msra.mxu0 %v1281
    %1645 = vmatprep.mubr.bf16.mxu0 %v646
    %1646 = vmatmul.mubr.bf16.gmra.mrb[0].mxu0 %v645
    %v1647 = vpop.f32.mrb[0].mxu0
    %v1648 = vadd.f32 %v810, %v1647
    %v1649 = vpop.f32.mrb[0].mxu0
    %v1650 = vpop.f32.mrb[0].mxu0
    %v1651 = vadd.f32 %v810, %v1650
    %v1652 = vpop.f32.mrb[0].mxu0
    %1653 = vmatprep.mubr.bf16.mxu0 %v648
    %1654 = vmatmul.mubr.bf16.gmra.mrb[0].mxu0 %v647
    %v1655 = vpop.f32.mrb[0].mxu0
    %v1656 = vadd.f32 %v810, %v1655
    %v1657 = vpop.f32.mrb[0].mxu0
    %v1658 = vpop.f32.mrb[0].mxu0
    %v1659 = vadd.f32 %v810, %v1658
    %v1660 = vpop.f32.mrb[0].mxu0
    %1661 = vmatprep.mubr.bf16.mxu0 %v650
    %1662 = vmatmul.mubr.bf16.gmra.mrb[0].mxu0 %v649
    %v1663 = vpop.f32.mrb[0].mxu0
    %v1664 = vadd.f32 %v810, %v1663
    %v1665 = vpop.f32.mrb[0].mxu0
    %v1666 = vpop.f32.mrb[0].mxu0
    %v1667 = vadd.f32 %v810, %v1666
    %v1668 = vpop.f32.mrb[0].mxu0
    %1669 = vmatprep.mubr.bf16.mxu0 %v652
    %1670 = vmatmul.mubr.bf16.gmra.mrb[0].mxu0 %v651
    %v1671 = vpop.f32.mrb[0].mxu0
    %v1672 = vadd.f32 %v810, %v1671
    %v1673 = vpop.f32.mrb[0].mxu0
    %v1674 = vpop.f32.mrb[0].mxu0
    %v1675 = vadd.f32 %v810, %v1674
    %v1676 = vpop.f32.mrb[0].mxu0
    %1677 = vdwg.mxu0
    %v1678 = vtanh.pop %v1429
    %v1679 = vtanh.pop %v1431
    %v1680 = vtanh.pop %v1502
    %v1681 = vtanh.pop %v1504
    %v1682 = vtanh.pop %v1575
    %v1683 = vtanh.pop %v1577
    %v1684 = vtanh.pop %v1648
    %v1685 = vtanh.pop %v1433
    %v1686 = vtanh.pop %v1435
    %v1687 = vtanh.pop %v1506
    %v1688 = vtanh.pop %v1508
    %v1689 = vtanh.pop %v1579
    %v1690 = vtanh.pop %v1581
    %v1691 = vtanh.pop %v1651
    %v1692 = vtanh.pop %v1439
    %v1693 = vtanh.pop %v1441
    %v1694 = vtanh.pop %v1512
    %v1695 = vtanh.pop %v1514
    %v1696 = vtanh.pop %v1585
    %v1697 = vtanh.pop %v1587
    %v1698 = vtanh.pop %v1656
    %v1699 = vtanh.pop %v1443
    %v1700 = vtanh.pop %v1445
    %v1701 = vtanh.pop %v1516
    %v1702 = vtanh.pop %v1518
    %v1703 = vtanh.pop %v1589
    %v1704 = vtanh.pop %v1591
    %v1705 = vtanh.pop %v1659
    %v1706 = vtanh.pop %v1449
    %v1707 = vtanh.pop %v1451
    %v1708 = vtanh.pop %v1522
    %v1709 = vtanh.pop %v1524
    %v1710 = vtanh.pop %v1595
    %v1711 = vtanh.pop %v1597
    %v1712 = vtanh.pop %v1664
    %v1713 = vtanh.pop %v1453
    %v1714 = vtanh.pop %v1455
    %v1715 = vtanh.pop %v1526
    %v1716 = vtanh.pop %v1528
    %v1717 = vtanh.pop %v1599
    %v1718 = vtanh.pop %v1601
    %v1719 = vtanh.pop %v1667
    %v1720 = vtanh.pop %v1459
    %v1721 = vtanh.pop %v1461
    %v1722 = vtanh.pop %v1532
    %v1723 = vtanh.pop %v1534
    %v1724 = vtanh.pop %v1605
    %v1725 = vtanh.pop %v1607
    %v1726 = vtanh.pop %v1672
    %v1727 = vtanh.pop %v1463
    %v1728 = vtanh.pop %v1465
    %v1729 = vtanh.pop %v1536
    %v1730 = vtanh.pop %v1538
    %v1731 = vtanh.pop %v1609
    %v1732 = vtanh.pop %v1611
    %v1733 = vtanh.pop %v1675
    %v1734 = vpack.c.bf16 %v1685, %v1678
    %v1735 = vpack.c.bf16 %v1686, %v1679
    %v1736 = vpack.c.bf16 %v1687, %v1680
    %v1737 = vpack.c.bf16 %v1688, %v1681
    %v1738 = vpack.c.bf16 %v1689, %v1682
    %v1739 = vpack.c.bf16 %v1690, %v1683
    %v1740 = vpack.c.bf16 %v1691, %v1684
    %v1741 = vpack.c.bf16 %v1699, %v1692
    %v1742 = vpack.c.bf16 %v1700, %v1693
    %v1743 = vpack.c.bf16 %v1701, %v1694
    %v1744 = vpack.c.bf16 %v1702, %v1695
    %v1745 = vpack.c.bf16 %v1703, %v1696
    %v1746 = vpack.c.bf16 %v1704, %v1697
    %v1747 = vpack.c.bf16 %v1705, %v1698
    %v1748 = vpack.c.bf16 %v1713, %v1706
    %v1749 = vpack.c.bf16 %v1714, %v1707
    %v1750 = vpack.c.bf16 %v1715, %v1708
    %v1751 = vpack.c.bf16 %v1716, %v1709
    %v1752 = vpack.c.bf16 %v1717, %v1710
    %v1753 = vpack.c.bf16 %v1718, %v1711
    %v1754 = vpack.c.bf16 %v1719, %v1712
    %v1755 = vpack.c.bf16 %v1727, %v1720
    %v1756 = vpack.c.bf16 %v1728, %v1721
    %v1757 = vpack.c.bf16 %v1729, %v1722
    %v1758 = vpack.c.bf16 %v1730, %v1723
    %v1759 = vpack.c.bf16 %v1731, %v1724
    %v1760 = vpack.c.bf16 %v1732, %v1725
    %v1761 = vpack.c.bf16 %v1733, %v1726
    %v1790 = vunpack.c.l.b16 %v1734
    %v1791 = vunpack.c.l.b16 %v1735
    %v1792 = vunpack.c.l.b16 %v1736
    %v1793 = vunpack.c.l.b16 %v1737
    %v1794 = vunpack.c.l.b16 %v1738
    %v1795 = vunpack.c.l.b16 %v1739
    %v1796 = vunpack.c.l.b16 %v1740
    %v1797 = vunpack.c.h.b16 %v1734
    %v1798 = vunpack.c.h.b16 %v1735
    %v1799 = vunpack.c.h.b16 %v1736
    %v1800 = vunpack.c.h.b16 %v1737
    %v1801 = vunpack.c.h.b16 %v1738
    %v1802 = vunpack.c.h.b16 %v1739
    %v1803 = vunpack.c.h.b16 %v1740
    %v1804 = vunpack.c.l.b16 %v1741
    %v1805 = vunpack.c.l.b16 %v1742
    %v1806 = vunpack.c.l.b16 %v1743
    %v1807 = vunpack.c.l.b16 %v1744
    %v1808 = vunpack.c.l.b16 %v1745
    %v1809 = vunpack.c.l.b16 %v1746
    %v1810 = vunpack.c.l.b16 %v1747
    %v1811 = vunpack.c.h.b16 %v1741
    %v1812 = vunpack.c.h.b16 %v1742
    %v1813 = vunpack.c.h.b16 %v1743
    %v1814 = vunpack.c.h.b16 %v1744
    %v1815 = vunpack.c.h.b16 %v1745
    %v1816 = vunpack.c.h.b16 %v1746
    %v1817 = vunpack.c.h.b16 %v1747
    %v1818 = vunpack.c.l.b16 %v1748
    %v1819 = vunpack.c.l.b16 %v1749
    %v1820 = vunpack.c.l.b16 %v1750
    %v1821 = vunpack.c.l.b16 %v1751
    %v1822 = vunpack.c.l.b16 %v1752
    %v1823 = vunpack.c.l.b16 %v1753
    %v1824 = vunpack.c.l.b16 %v1754
    %v1825 = vunpack.c.h.b16 %v1748
    %v1826 = vunpack.c.h.b16 %v1749
    %v1827 = vunpack.c.h.b16 %v1750
    %v1828 = vunpack.c.h.b16 %v1751
    %v1829 = vunpack.c.h.b16 %v1752
    %v1830 = vunpack.c.h.b16 %v1753
    %v1831 = vunpack.c.h.b16 %v1754
    %v1832 = vunpack.c.l.b16 %v1755
    %v1833 = vunpack.c.l.b16 %v1756
    %v1834 = vunpack.c.l.b16 %v1757
    %v1835 = vunpack.c.l.b16 %v1758
    %v1836 = vunpack.c.l.b16 %v1759
    %v1837 = vunpack.c.l.b16 %v1760
    %v1838 = vunpack.c.l.b16 %v1761
    %v1839 = vunpack.c.h.b16 %v1755
    %v1840 = vunpack.c.h.b16 %v1756
    %v1841 = vunpack.c.h.b16 %v1757
    %v1842 = vunpack.c.h.b16 %v1758
    %v1843 = vunpack.c.h.b16 %v1759
    %v1844 = vunpack.c.h.b16 %v1760
    %v1845 = vunpack.c.h.b16 %v1761
    %v1846 = vpack.c.b16 %v1791, %v1790
    %v1847 = vpack.c.b16 %v1793, %v1792
    %v1848 = vpack.c.b16 %v1795, %v1794
    %v1849 = vpack.c.b16 %v1796, %v1796
    %v1850 = vpack.c.b16 %v1798, %v1797
    %v1851 = vpack.c.b16 %v1800, %v1799
    %v1852 = vpack.c.b16 %v1802, %v1801
    %v1853 = vpack.c.b16 %v1803, %v1803
    %v1854 = vpack.c.b16 %v1805, %v1804
    %v1855 = vpack.c.b16 %v1807, %v1806
    %v1856 = vpack.c.b16 %v1809, %v1808
    %v1857 = vpack.c.b16 %v1810, %v1810
    %v1858 = vpack.c.b16 %v1812, %v1811
    %v1859 = vpack.c.b16 %v1814, %v1813
    %v1860 = vpack.c.b16 %v1816, %v1815
    %v1861 = vpack.c.b16 %v1817, %v1817
    %v1862 = vpack.c.b16 %v1819, %v1818
    %v1863 = vpack.c.b16 %v1821, %v1820
    %v1864 = vpack.c.b16 %v1823, %v1822
    %v1865 = vpack.c.b16 %v1824, %v1824
    %v1866 = vpack.c.b16 %v1826, %v1825
    %v1867 = vpack.c.b16 %v1828, %v1827
    %v1868 = vpack.c.b16 %v1830, %v1829
    %v1869 = vpack.c.b16 %v1831, %v1831
    %v1870 = vpack.c.b16 %v1833, %v1832
    %v1871 = vpack.c.b16 %v1835, %v1834
    %v1872 = vpack.c.b16 %v1837, %v1836
    %v1873 = vpack.c.b16 %v1838, %v1838
    %v1874 = vpack.c.b16 %v1840, %v1839
    %v1875 = vpack.c.b16 %v1842, %v1841
    %v1876 = vpack.c.b16 %v1844, %v1843
    %v1877 = vpack.c.b16 %v1845, %v1845
    %1910 = vst [vmem:[#allocation10] sm:$0xff] %v1846
    %1911 = vst [vmem:[#allocation10 + $0x8] sm:$0xff] %v1847
    %1912 = vst [vmem:[#allocation10 + $0x10] sm:$0xff] %v1848
    %1913 = vst [vmem:[#allocation10 + $0x18] sm:$0xf] %v1849
    %1914 = vst [vmem:[#allocation10 + $0x1c] sm:$0xff] %v1850
    %1915 = vst [vmem:[#allocation10 + $0x24] sm:$0xff] %v1851
    %1916 = vst [vmem:[#allocation10 + $0x2c] sm:$0xff] %v1852
    %1917 = vst [vmem:[#allocation10 + $0x34] sm:$0xf] %v1853
    %1918 = vst [vmem:[#allocation10 + $0x38] sm:$0xff] %v1854
    %1919 = vst [vmem:[#allocation10 + $0x40] sm:$0xff] %v1855
    %1920 = vst [vmem:[#allocation10 + $0x48] sm:$0xff] %v1856
    %1921 = vst [vmem:[#allocation10 + $0x50] sm:$0xf] %v1857
    %1922 = vst [vmem:[#allocation10 + $0x54] sm:$0xff] %v1858
    %1923 = vst [vmem:[#allocation10 + $0x5c] sm:$0xff] %v1859
    %1924 = vst [vmem:[#allocation10 + $0x64] sm:$0xff] %v1860
    %1925 = vst [vmem:[#allocation10 + $0x6c] sm:$0xf] %v1861
    %1926 = vst [vmem:[#allocation10 + $0x70] sm:$0xff] %v1862
    %1927 = vst [vmem:[#allocation10 + $0x78] sm:$0xff] %v1863
    %1928 = vst [vmem:[#allocation10 + $0x80] sm:$0xff] %v1864
    %1929 = vst [vmem:[#allocation10 + $0x88] sm:$0xf] %v1865
    %1930 = vst [vmem:[#allocation10 + $0x8c] sm:$0xff] %v1866
    %1931 = vst [vmem:[#allocation10 + $0x94] sm:$0xff] %v1867
    %1932 = vst [vmem:[#allocation10 + $0x9c] sm:$0xff] %v1868
    %1933 = vst [vmem:[#allocation10 + $0xa4] sm:$0xf] %v1869
    %1934 = vst [vmem:[#allocation10 + $0xa8] sm:$0xff] %v1870
    %1935 = vst [vmem:[#allocation10 + $0xb0] sm:$0xff] %v1871
    %1936 = vst [vmem:[#allocation10 + $0xb8] sm:$0xff] %v1872
    %1937 = vst [vmem:[#allocation10 + $0xc0] sm:$0xf] %v1873
    %1938 = vst [vmem:[#allocation10 + $0xc4] sm:$0xff] %v1874
    %1939 = vst [vmem:[#allocation10 + $0xcc] sm:$0xff] %v1875
    %1940 = vst [vmem:[#allocation10 + $0xd4] sm:$0xff] %v1876
    %1941 = vst [vmem:[#allocation10 + $0xdc] sm:$0xf] %v1877
    // Predicated region
    $region46: #{tpu_custom_call.1} parent=1 // pred_check
      _
    $region47: #{tpu_custom_call.1} parent=1 // pred_check_branch
      %1943 = sbr.rel (0) target = $region49
    $region48: #{tpu_custom_call.1} parent=1 // pred_region
      %s1945 = ssub.s32 3584, 3584
      %1946 = vsyncadd [#allocation4], %s1945
      %s1947 = sshll.u32 [#allocation10], 4
      %s1948 = int_to_ptr.vmem [resolvable:$true] %s1947
      %1953 = dma.vmem_to_hbm [thread:$0]  %s1948, 3584, %s7, [#allocation4], 448, 448, 28
    $region49: #{tpu_custom_call.1} parent=1 // pred_fallthru
      _
    // Predicated region
    $region50: #{tpu_custom_call.1} parent=1 // pred_check
      _
    $region51: #{tpu_custom_call.1} parent=1 // pred_check_branch
      %1955 = sbr.rel (0) target = $region53
    $region52: #{tpu_custom_call.1} parent=1 // pred_region
      %1956 = dma.done [#allocation4], 3584
    $region53: #{tpu_custom_call.1} parent=1 // pred_fallthru
      _
    %1957 = vsyncpa [#allocation3], 1
    %1958 = vsyncpa [#allocation6], 1
    %1959 = vsyncpa [#allocation9], 1
    %1960 = vsyncpa [#allocation4], 1

</llo_original>
